<compile_context>
chip_gen: v6e
topology: v6e:2x2x1
jax: 0.10.0
libtpu: 0.0.40
codegen_flags: <defaults>
</compile_context>

<pallas_src>
import jax
import jax.numpy as jnp
from jax import lax
from jax.experimental import pallas as pl
from jax.experimental.pallas import tpu as pltpu


def textrcnn_kernel(emb_ref,                       # (S, BB, E)    bf16, seq-major
                    wih_fs_ref, wih_bs_ref,        # (E, 8H)       bf16 (spread fwd / bwd cols)
                    b_cat_ref,                     # (1, 8H)       f32  (b_ih+b_hh, interleaved)
                    whh_ref,                       # (2H, 8H)      bf16 (block-diag, interleaved)
                    wlin_e_ref, wlin_fb_ref,       # (E, H) / (2H, H)  bf16
                    blin_ref,                      # (1, H)        f32
                    wfc_ref, bfc_ref,              # (H, CP) bf16 / (1, CP) f32
                    out_ref,                       # (BB, CP)      f32
                    gx_ref,                        # (S, BB, 8H)   f32  scratch (gate inputs)
                    hs_ref):                       # (S, BB, 2H)   bf16 scratch ([h_fwd|h_bwd])
    S, BB, E = emb_ref.shape
    H = hs_ref.shape[-1] // 2
    G = gx_ref.shape[-1]                           # 8H
    CH = max(1, min(S, 16))                        # static sequence chunk

    # Weights loaded once; resident across all phases.
    wih_fs = wih_fs_ref[...]
    wih_bs = wih_bs_ref[...]
    b_cat = b_cat_ref[...]
    whh = whh_ref[...]

    # ---- Phase 1: hoisted, S-chunked input projection into the gx scratch ----
    # gx[t] = fwd-gate inputs at time t  interleaved with  bwd-gate inputs at
    # time (S-1-t), so each recurrence step reads ONE contiguous (BB, 8H) tile.
    for t0 in range(0, S, CH):
        t1 = min(t0 + CH, S)
        c = t1 - t0
        e_f = emb_ref[t0:t1].reshape(c * BB, E)
        # Backward-direction rows, gathered in reversed time order with static
        # indices (avoids an in-kernel lax.rev).
        e_b = jnp.concatenate([emb_ref[S - 1 - t] for t in range(t0, t1)], axis=0)
        g = (jnp.dot(e_f, wih_fs, preferred_element_type=jnp.float32)
             + jnp.dot(e_b, wih_bs, preferred_element_type=jnp.float32)
             + b_cat)
        gx_ref[t0:t1] = g.reshape(c, BB, G)

    # ---- Phase 2: fused bidirectional recurrence, one matmul per step --------
    def step(t, h_prev, c_prev, tb):
        # Single block-diagonal recurrent matmul: (BB,2H) @ (2H,8H).
        gates = gx_ref[t] + jnp.dot(h_prev, whh, preferred_element_type=jnp.float32)
        sg = jax.nn.sigmoid(gates)                 # one lane-dense EUP pass over all 8H
        g_g = jnp.tanh(gates[:, 4 * H:6 * H])      # candidate gate, contiguous 2H slice
        c_new = sg[:, 2 * H:4 * H] * c_prev + sg[:, 0:2 * H] * g_g
        h_new = (sg[:, 6 * H:8 * H] * jnp.tanh(c_new)).astype(jnp.bfloat16)
        hs_ref[t, :, :H] = h_new[:, :H]            # forward hidden  -> time t
        hs_ref[tb, :, H:] = h_new[:, H:]           # backward hidden -> time S-1-t
        return h_new, c_new

    h0 = jnp.zeros((BB, 2 * H), jnp.bfloat16)
    c0 = jnp.zeros((BB, 2 * H), jnp.float32)
    if S <= 32:
        # Short sequences: full unroll (LLO scheduler sees the whole loop).
        h_prev, c_prev = h0, c0
        for t in range(S):
            h_prev, c_prev = step(t, h_prev, c_prev, S - 1 - t)
    else:
        # Long sequences: bounded register pressure / code size.
        def body(t, carry):
            return step(t, carry[0], carry[1], S - 1 - t)
        lax.fori_loop(0, S, body, (h0, c0), unroll=4)

    # ---- Phase 3: cat([emb, h_fwd, h_bwd]) -> linear -> tanh -> running max --
    wlin_e = wlin_e_ref[...]
    wlin_fb = wlin_fb_ref[...]
    blin = blin_ref[...]
    pooled = jnp.full((BB, H), -jnp.inf, jnp.float32)
    for t0 in range(0, S, CH):
        t1 = min(t0 + CH, S)
        c = t1 - t0
        e = emb_ref[t0:t1].reshape(c * BB, E)
        hcat = hs_ref[t0:t1].reshape(c * BB, 2 * H)
        z = jnp.tanh(jnp.dot(e, wlin_e, preferred_element_type=jnp.float32)
                     + jnp.dot(hcat, wlin_fb, preferred_element_type=jnp.float32)
                     + blin)
        pooled = jnp.maximum(pooled, jnp.max(z.reshape(c, BB, H), axis=0))

    # TODO(synk): dropout is eval-mode identity here (no RNG mask applied).
    out_ref[...] = (jnp.dot(pooled.astype(jnp.bfloat16), wfc_ref[...],
                            preferred_element_type=jnp.float32) + bfc_ref[...])


def _round_up(x, m):
    return ((x + m - 1) // m) * m


def _interleave_gate_cols(w_f, w_b, H):
    """Reorder two (..., 4H) gate-major tensors ([i|f|g|o] per direction) into one
    (..., 8H) tensor laid out [i_f|i_b|f_f|f_b|g_f|g_b|o_f|o_b] so that every gate
    group is lane-contiguous and aligned with the [fwd|bwd] concatenated state."""
    parts = []
    for k in range(4):
        parts.append(w_f[..., k * H:(k + 1) * H])
        parts.append(w_b[..., k * H:(k + 1) * H])
    return jnp.concatenate(parts, axis=-1)


def textrcnn_forward(ids, params):
    """ids: (B, S) int32 token ids.  Returns logits (B, num_classes)."""
    (emb_table, wih_f, whh_f, b_f, wih_b, whh_b, b_b,
     wlin_e, wlin_f, wlin_b, blin, wfc, bfc) = params

    B, S = ids.shape
    E = emb_table.shape[1]
    H = whh_f.shape[0]
    C = wfc.shape[1]
    bf16 = jnp.bfloat16

    # Embedding gather directly in seq-major bf16 (halves gather/pad traffic).
    emb_sbe = jnp.take(emb_table.astype(bf16), ids.T, axis=0)          # (S, B, E)

    # Batch padding / blocking: >=2 blocks when possible (so ("parallel",) can
    # shard across 2 TensorCores on v7x) but fat blocks (<=256) to amortize the
    # ~0.35us/step grid overhead on single-TC parts.
    B_pad = _round_up(max(B, 8), 8)
    if B_pad >= 16:
        block_b = min(256, _round_up(B_pad // 2, 8))
    else:
        block_b = B_pad
    B_pad = _round_up(B_pad, block_b)
    if B_pad != B:
        emb_sbe = jnp.pad(emb_sbe, ((0, 0), (0, B_pad - B), (0, 0)))

    # --- weight re-layout (plain-JAX glue, done once) ---
    z_ih = jnp.zeros_like(wih_f)
    z_hh = jnp.zeros_like(whh_f)
    # Input-projection weights spread onto interleaved gate columns (zeros in the
    # other direction's columns) so the hoisted projection writes a single dense
    # (BB, 8H) tile with fwd(t) / bwd(S-1-t) already fused.
    wih_fs = _interleave_gate_cols(wih_f, z_ih, H).astype(bf16)        # (E, 8H)
    wih_bs = _interleave_gate_cols(z_ih, wih_b, H).astype(bf16)        # (E, 8H)
    b_cat = _interleave_gate_cols(b_f, b_b, H).astype(jnp.float32)     # (1, 8H)
    # Block-diagonal recurrent weight in the interleaved layout: one matmul/step.
    whh_cat = jnp.concatenate(
        [_interleave_gate_cols(whh_f, z_hh, H),                        # rows 0:H   <- h_fwd
         _interleave_gate_cols(z_hh, whh_b, H)],                       # rows H:2H  <- h_bwd
        axis=0).astype(bf16)                                           # (2H, 8H)
    # Stacked linear weight for [h_fwd | h_bwd].
    wlin_fb = jnp.concatenate([wlin_f, wlin_b], axis=0).astype(bf16)   # (2H, H)

    # Lane-dense logits: pad num_classes up to 128 with zero columns.
    CP = _round_up(C, 128)
    wfc_p = jnp.zeros((H, CP), bf16).at[:, :C].set(wfc.astype(bf16))
    bfc_p = jnp.zeros((1, CP), jnp.float32).at[:, :C].set(bfc.astype(jnp.float32))

    full2d = lambda b: (0, 0)
    in_specs = [
        pl.BlockSpec((S, block_b, E), lambda b: (0, b, 0)),    # embeddings (batch-blocked)
        pl.BlockSpec((E, 8 * H), full2d),                      # wih_fs
        pl.BlockSpec((E, 8 * H), full2d),                      # wih_bs
        pl.BlockSpec((1, 8 * H), full2d),                      # b_cat
        pl.BlockSpec((2 * H, 8 * H), full2d),                  # whh_cat (block-diag)
        pl.BlockSpec((E, H), full2d),                          # wlin_e
        pl.BlockSpec((2 * H, H), full2d),                      # wlin_fb (stacked)
        pl.BlockSpec((1, H), full2d),                          # blin
        pl.BlockSpec((H, CP), full2d),                         # wfc (lane-padded)
        pl.BlockSpec((1, CP), full2d),                         # bfc (lane-padded)
    ]
    out_spec = pl.BlockSpec((block_b, CP), lambda b: (b, 0))

    logits_p = pl.pallas_call(
        textrcnn_kernel,
        out_shape=jax.ShapeDtypeStruct((B_pad, CP), jnp.float32),
        grid=(B_pad // block_b,),
        in_specs=in_specs,
        out_specs=out_spec,
        scratch_shapes=[
            pltpu.VMEM((S, block_b, 8 * H), jnp.float32),      # gx: fused gate inputs
            pltpu.VMEM((S, block_b, 2 * H), jnp.bfloat16),     # hs: [h_fwd | h_bwd]
        ],
        compiler_params=pltpu.CompilerParams(
            dimension_semantics=("parallel",),                 # batch blocks over TCs
            vmem_limit_bytes=48 * 1024 * 1024,                 # headroom on v7x (64 MiB part)
        ),
    )(emb_sbe, wih_fs, wih_bs, b_cat, whh_cat,
      wlin_e.astype(bf16), wlin_fb, blin.astype(jnp.float32), wfc_p, bfc_p)

    return logits_p[:B, :C]


# ---------------------------- pure-JAX reference ----------------------------
def _lstm_dir_ref(xs, wih, whh, b):   # xs: (S, B, E)
    S, B, _ = xs.shape
    H = whh.shape[0]

    def step(carry, x):
        h, c = carry
        g = x @ wih + h @ whh + b
        i = jax.nn.sigmoid(g[:, 0 * H:1 * H])
        f = jax.nn.sigmoid(g[:, 1 * H:2 * H])
        gg = jnp.tanh(g[:, 2 * H:3 * H])
        o = jax.nn.sigmoid(g[:, 3 * H:4 * H])
        c = f * c + i * gg
        h = o * jnp.tanh(c)
        return (h, c), h

    init = (jnp.zeros((B, H), jnp.float32), jnp.zeros((B, H), jnp.float32))
    _, hs = lax.scan(step, init, xs)
    return hs                                    # (S, B, H)


def textrcnn_reference(ids, params):
    (emb_table, wih_f, whh_f, b_f, wih_b, whh_b, b_b,
     wlin_e, wlin_f, wlin_b, blin, wfc, bfc) = params
    embedded = jnp.take(emb_table, ids, axis=0)
    emb_sbe = jnp.transpose(embedded, (1, 0, 2)).astype(jnp.float32)
    hs_f = _lstm_dir_ref(emb_sbe, wih_f, whh_f, b_f)
    hs_b = _lstm_dir_ref(emb_sbe[::-1], wih_b, whh_b, b_b)[::-1]
    z = jnp.tanh(emb_sbe @ wlin_e + hs_f @ wlin_f + hs_b @ wlin_b + blin)
    pooled = z.max(axis=0)                       # max_pool1d over seq
    return pooled @ wfc + bfc


if __name__ == "__main__":
    # Small shapes consistent with the module's forward.
    V, E, H, C = 50, 32, 32, 4       # vocab, embedding_dim, hidden_dim, num_classes
    B, S = 2, 8                      # batch, seq_len

    key = jax.random.PRNGKey(0)
    ks = jax.random.split(key, 16)

    def rnd(k, shape, scale=0.1):
        return (scale * jax.random.normal(k, shape)).astype(jnp.float32)

    emb_table = rnd(ks[0], (V, E)).at[0].set(0.0)           # padding_idx=0
    wih_f = rnd(ks[1], (E, 4 * H)); whh_f = rnd(ks[2], (H, 4 * H))
    b_f = rnd(ks[3], (1, 4 * H))                            # b_ih + b_hh combined
    wih_b = rnd(ks[4], (E, 4 * H)); whh_b = rnd(ks[5], (H, 4 * H))
    b_b = rnd(ks[6], (1, 4 * H))
    # Linear(E + 2H -> H), split along the concat axis: [emb | h_fwd | h_bwd]
    wlin_e = rnd(ks[7], (E, H)); wlin_f = rnd(ks[8], (H, H)); wlin_b = rnd(ks[9], (H, H))
    blin = rnd(ks[10], (1, H))
    wfc = rnd(ks[11], (H, C)); bfc = rnd(ks[12], (1, C))

    params = (emb_table, wih_f, whh_f, b_f, wih_b, whh_b, b_b,
              wlin_e, wlin_f, wlin_b, blin, wfc, bfc)

    ids = jax.random.randint(ks[13], (B, S), 0, V, dtype=jnp.int32)

    logits = jax.block_until_ready(textrcnn_forward(ids, params))
    ref = jax.block_until_ready(textrcnn_reference(ids, params))

    assert logits.shape == (B, C)
    max_diff = float(jnp.max(jnp.abs(logits - ref)))
    assert max_diff < 1e-2, f"mismatch vs reference: {max_diff}"
    print("KERNEL_OK")
</pallas_src>

<mosaic_0001>
module attributes {stable_mosaic.version = 11 : i64} {
  func.func @textrcnn_kernel(%arg0: i32, %arg1: memref<8x8x32xbf16, #tpu.memory_space<vmem>>, %arg2: memref<32x256xbf16, #tpu.memory_space<vmem>>, %arg3: memref<32x256xbf16, #tpu.memory_space<vmem>>, %arg4: memref<1x256xf32, #tpu.memory_space<vmem>>, %arg5: memref<64x256xbf16, #tpu.memory_space<vmem>>, %arg6: memref<32x32xbf16, #tpu.memory_space<vmem>>, %arg7: memref<64x32xbf16, #tpu.memory_space<vmem>>, %arg8: memref<1x32xf32, #tpu.memory_space<vmem>>, %arg9: memref<32x128xbf16, #tpu.memory_space<vmem>>, %arg10: memref<1x128xf32, #tpu.memory_space<vmem>>, %arg11: memref<8x128xf32, #tpu.memory_space<vmem>>, %arg12: memref<8x8x256xf32, #tpu.memory_space<vmem>>, %arg13: memref<8x8x64xbf16, #tpu.memory_space<vmem>>) attributes {dimension_semantics = [#tpu.dimension_semantics<parallel>], iteration_bounds = array<i64: 1>, scalar_prefetch = 0 : i64, scratch_operands = 2 : i64, tpu.core_type = #tpu.core_type<tc>, window_params = [{transform_indices = @transform_0, window_bounds = array<i64: 8, 8, 32>}, {pipeline_mode = #tpu.pipeline_mode<synchronous>, transform_indices = @transform_1, window_bounds = array<i64: 32, 256>}, {pipeline_mode = #tpu.pipeline_mode<synchronous>, transform_indices = @transform_2, window_bounds = array<i64: 32, 256>}, {pipeline_mode = #tpu.pipeline_mode<synchronous>, transform_indices = @transform_3, window_bounds = array<i64: 1, 256>}, {pipeline_mode = #tpu.pipeline_mode<synchronous>, transform_indices = @transform_4, window_bounds = array<i64: 64, 256>}, {pipeline_mode = #tpu.pipeline_mode<synchronous>, transform_indices = @transform_5, window_bounds = array<i64: 32, 32>}, {pipeline_mode = #tpu.pipeline_mode<synchronous>, transform_indices = @transform_6, window_bounds = array<i64: 64, 32>}, {pipeline_mode = #tpu.pipeline_mode<synchronous>, transform_indices = @transform_7, window_bounds = array<i64: 1, 32>}, {pipeline_mode = #tpu.pipeline_mode<synchronous>, transform_indices = @transform_8, window_bounds = array<i64: 32, 128>}, {pipeline_mode = #tpu.pipeline_mode<synchronous>, transform_indices = @transform_9, window_bounds = array<i64: 1, 128>}, {transform_indices = @transform_10, window_bounds = array<i64: 8, 128>}]} {
    %c0 = arith.constant 0 : index
    %c0_0 = arith.constant 0 : index
    %0 = vector.load %arg2[%c0, %c0_0] : memref<32x256xbf16, #tpu.memory_space<vmem>>, vector<32x256xbf16>
    %c0_1 = arith.constant 0 : index
    %c0_2 = arith.constant 0 : index
    %1 = vector.load %arg3[%c0_1, %c0_2] : memref<32x256xbf16, #tpu.memory_space<vmem>>, vector<32x256xbf16>
    %c0_3 = arith.constant 0 : index
    %c0_4 = arith.constant 0 : index
    %2 = vector.load %arg4[%c0_3, %c0_4] : memref<1x256xf32, #tpu.memory_space<vmem>>, vector<1x256xf32>
    %c0_5 = arith.constant 0 : index
    %c0_6 = arith.constant 0 : index
    %3 = vector.load %arg5[%c0_5, %c0_6] : memref<64x256xbf16, #tpu.memory_space<vmem>>, vector<64x256xbf16>
    %c0_7 = arith.constant 0 : index
    %c0_8 = arith.constant 0 : index
    %c0_9 = arith.constant 0 : index
    %4 = vector.load %arg1[%c0_7, %c0_8, %c0_9] : memref<8x8x32xbf16, #tpu.memory_space<vmem>>, vector<8x8x32xbf16>
    %5 = vector.shape_cast %4 : vector<8x8x32xbf16> to vector<64x32xbf16>
    %c7 = arith.constant 7 : index
    %c0_10 = arith.constant 0 : index
    %c0_11 = arith.constant 0 : index
    %6 = vector.load %arg1[%c7, %c0_10, %c0_11] : memref<8x8x32xbf16, #tpu.memory_space<vmem>>, vector<1x8x32xbf16>
    %7 = vector.shape_cast %6 : vector<1x8x32xbf16> to vector<8x32xbf16>
    %c6 = arith.constant 6 : index
    %c0_12 = arith.constant 0 : index
    %c0_13 = arith.constant 0 : index
    %8 = vector.load %arg1[%c6, %c0_12, %c0_13] : memref<8x8x32xbf16, #tpu.memory_space<vmem>>, vector<1x8x32xbf16>
    %9 = vector.shape_cast %8 : vector<1x8x32xbf16> to vector<8x32xbf16>
    %c5 = arith.constant 5 : index
    %c0_14 = arith.constant 0 : index
    %c0_15 = arith.constant 0 : index
    %10 = vector.load %arg1[%c5, %c0_14, %c0_15] : memref<8x8x32xbf16, #tpu.memory_space<vmem>>, vector<1x8x32xbf16>
    %11 = vector.shape_cast %10 : vector<1x8x32xbf16> to vector<8x32xbf16>
    %c4 = arith.constant 4 : index
    %c0_16 = arith.constant 0 : index
    %c0_17 = arith.constant 0 : index
    %12 = vector.load %arg1[%c4, %c0_16, %c0_17] : memref<8x8x32xbf16, #tpu.memory_space<vmem>>, vector<1x8x32xbf16>
    %13 = vector.shape_cast %12 : vector<1x8x32xbf16> to vector<8x32xbf16>
    %c3 = arith.constant 3 : index
    %c0_18 = arith.constant 0 : index
    %c0_19 = arith.constant 0 : index
    %14 = vector.load %arg1[%c3, %c0_18, %c0_19] : memref<8x8x32xbf16, #tpu.memory_space<vmem>>, vector<1x8x32xbf16>
    %15 = vector.shape_cast %14 : vector<1x8x32xbf16> to vector<8x32xbf16>
    %c2 = arith.constant 2 : index
    %c0_20 = arith.constant 0 : index
    %c0_21 = arith.constant 0 : index
    %16 = vector.load %arg1[%c2, %c0_20, %c0_21] : memref<8x8x32xbf16, #tpu.memory_space<vmem>>, vector<1x8x32xbf16>
    %17 = vector.shape_cast %16 : vector<1x8x32xbf16> to vector<8x32xbf16>
    %c1 = arith.constant 1 : index
    %c0_22 = arith.constant 0 : index
    %c0_23 = arith.constant 0 : index
    %18 = vector.load %arg1[%c1, %c0_22, %c0_23] : memref<8x8x32xbf16, #tpu.memory_space<vmem>>, vector<1x8x32xbf16>
    %19 = vector.shape_cast %18 : vector<1x8x32xbf16> to vector<8x32xbf16>
    %c0_24 = arith.constant 0 : index
    %c0_25 = arith.constant 0 : index
    %c0_26 = arith.constant 0 : index
    %20 = vector.load %arg1[%c0_24, %c0_25, %c0_26] : memref<8x8x32xbf16, #tpu.memory_space<vmem>>, vector<1x8x32xbf16>
    %21 = vector.shape_cast %20 : vector<1x8x32xbf16> to vector<8x32xbf16>
    %22 = tpu.concatenate %7, %9, %11, %13, %15, %17, %19, %21 in 0 : vector<8x32xbf16>, vector<8x32xbf16>, vector<8x32xbf16>, vector<8x32xbf16>, vector<8x32xbf16>, vector<8x32xbf16>, vector<8x32xbf16>, vector<8x32xbf16> -> vector<64x32xbf16>
    %cst = arith.constant dense<0.000000e+00> : vector<64x256xf32>
    %23 = tpu.matmul %5, %0, %cst {dimension_numbers = #tpu.dot_dimension_numbers<[1], [0], [0], [1], [0, 0, 1, 1], [], []>} : vector<64x32xbf16>, vector<32x256xbf16>, vector<64x256xf32> -> vector<64x256xf32>
    %cst_27 = arith.constant dense<0.000000e+00> : vector<64x256xf32>
    %24 = tpu.matmul %22, %1, %cst_27 {dimension_numbers = #tpu.dot_dimension_numbers<[1], [0], [0], [1], [0, 0, 1, 1], [], []>} : vector<64x32xbf16>, vector<32x256xbf16>, vector<64x256xf32> -> vector<64x256xf32>
    %25 = arith.addf %23, %24 : vector<64x256xf32>
    %26 = vector.broadcast %2 : vector<1x256xf32> to vector<64x256xf32>
    %27 = arith.addf %25, %26 : vector<64x256xf32>
    %28 = vector.shape_cast %27 : vector<64x256xf32> to vector<8x8x256xf32>
    %c0_28 = arith.constant 0 : index
    %c0_29 = arith.constant 0 : index
    %c0_30 = arith.constant 0 : index
    %29 = vector.load %arg12[%c0_28, %c0_29, %c0_30] : memref<8x8x256xf32, #tpu.memory_space<vmem>>, vector<8x8x256xf32>
    tpu.vector_store %arg12[%c0_28, %c0_29, %c0_30], %28 {strides = array<i32>} : memref<8x8x256xf32, #tpu.memory_space<vmem>>, vector<8x8x256xf32>,
    %cst_31 = arith.constant 0.000000e+00 : bf16
    %30 = vector.broadcast %cst_31 : bf16 to vector<8x64xbf16>
    %cst_32 = arith.constant 0.000000e+00 : f32
    %31 = vector.broadcast %cst_32 : f32 to vector<8x64xf32>
    %c0_33 = arith.constant 0 : index
    %c0_34 = arith.constant 0 : index
    %c0_35 = arith.constant 0 : index
    %32 = vector.load %arg12[%c0_33, %c0_34, %c0_35] : memref<8x8x256xf32, #tpu.memory_space<vmem>>, vector<1x8x256xf32>
    %33 = vector.shape_cast %32 : vector<1x8x256xf32> to vector<8x256xf32>
    %cst_36 = arith.constant dense<0.000000e+00> : vector<8x256xf32>
    %34 = tpu.matmul %30, %3, %cst_36 {dimension_numbers = #tpu.dot_dimension_numbers<[1], [0], [0], [1], [0, 0, 1, 1], [], []>} : vector<8x64xbf16>, vector<64x256xbf16>, vector<8x256xf32> -> vector<8x256xf32>
    %35 = arith.addf %33, %34 : vector<8x256xf32>
    %36 = arith.negf %35 : vector<8x256xf32>
    %37 = math.exp %36 : vector<8x256xf32>
    %cst_37 = arith.constant 1.000000e+00 : f32
    %38 = vector.broadcast %cst_37 : f32 to vector<8x256xf32>
    %39 = arith.addf %38, %37 : vector<8x256xf32>
    %40 = arith.divf %38, %39 : vector<8x256xf32>
    %41 = vector.extract_strided_slice %35 {offsets = [0, 128], sizes = [8, 64], strides = [1, 1]} : vector<8x256xf32> to vector<8x64xf32>
    %42 = math.tanh %41 : vector<8x64xf32>
    %43 = vector.extract_strided_slice %40 {offsets = [0, 64], sizes = [8, 64], strides = [1, 1]} : vector<8x256xf32> to vector<8x64xf32>
    %44 = arith.mulf %43, %31 : vector<8x64xf32>
    %45 = vector.extract_strided_slice %40 {offsets = [0, 0], sizes = [8, 64], strides = [1, 1]} : vector<8x256xf32> to vector<8x64xf32>
    %46 = arith.mulf %45, %42 : vector<8x64xf32>
    %47 = arith.addf %44, %46 : vector<8x64xf32>
    %48 = vector.extract_strided_slice %40 {offsets = [0, 192], sizes = [8, 64], strides = [1, 1]} : vector<8x256xf32> to vector<8x64xf32>
    %49 = math.tanh %47 : vector<8x64xf32>
    %50 = arith.mulf %48, %49 : vector<8x64xf32>
    %51 = arith.truncf %50 : vector<8x64xf32> to vector<8x64xbf16>
    %52 = vector.extract_strided_slice %51 {offsets = [0, 0], sizes = [8, 32], strides = [1, 1]} : vector<8x64xbf16> to vector<8x32xbf16>
    %c0_38 = arith.constant 0 : index
    %c0_39 = arith.constant 0 : index
    %c0_40 = arith.constant 0 : index
    %53 = vector.load %arg13[%c0_38, %c0_39, %c0_40] : memref<8x8x64xbf16, #tpu.memory_space<vmem>>, vector<1x8x32xbf16>
    %54 = vector.shape_cast %53 : vector<1x8x32xbf16> to vector<8x32xbf16>
    %55 = vector.shape_cast %52 : vector<8x32xbf16> to vector<1x8x32xbf16>
    tpu.vector_store %arg13[%c0_38, %c0_39, %c0_40], %55 {strides = array<i32>} : memref<8x8x64xbf16, #tpu.memory_space<vmem>>, vector<1x8x32xbf16>,
    %56 = vector.extract_strided_slice %51 {offsets = [0, 32], sizes = [8, 32], strides = [1, 1]} : vector<8x64xbf16> to vector<8x32xbf16>
    %c7_41 = arith.constant 7 : index
    %c0_42 = arith.constant 0 : index
    %c32 = arith.constant 32 : index
    %57 = vector.load %arg13[%c7_41, %c0_42, %c32] : memref<8x8x64xbf16, #tpu.memory_space<vmem>>, vector<1x8x32xbf16>
    %58 = vector.shape_cast %57 : vector<1x8x32xbf16> to vector<8x32xbf16>
    %59 = vector.shape_cast %56 : vector<8x32xbf16> to vector<1x8x32xbf16>
    tpu.vector_store %arg13[%c7_41, %c0_42, %c32], %59 {strides = array<i32>} : memref<8x8x64xbf16, #tpu.memory_space<vmem>>, vector<1x8x32xbf16>,
    %c1_43 = arith.constant 1 : index
    %c0_44 = arith.constant 0 : index
    %c0_45 = arith.constant 0 : index
    %60 = vector.load %arg12[%c1_43, %c0_44, %c0_45] : memref<8x8x256xf32, #tpu.memory_space<vmem>>, vector<1x8x256xf32>
    %61 = vector.shape_cast %60 : vector<1x8x256xf32> to vector<8x256xf32>
    %cst_46 = arith.constant dense<0.000000e+00> : vector<8x256xf32>
    %62 = tpu.matmul %51, %3, %cst_46 {dimension_numbers = #tpu.dot_dimension_numbers<[1], [0], [0], [1], [0, 0, 1, 1], [], []>} : vector<8x64xbf16>, vector<64x256xbf16>, vector<8x256xf32> -> vector<8x256xf32>
    %63 = arith.addf %61, %62 : vector<8x256xf32>
    %64 = arith.negf %63 : vector<8x256xf32>
    %65 = math.exp %64 : vector<8x256xf32>
    %cst_47 = arith.constant 1.000000e+00 : f32
    %66 = vector.broadcast %cst_47 : f32 to vector<8x256xf32>
    %67 = arith.addf %66, %65 : vector<8x256xf32>
    %68 = arith.divf %66, %67 : vector<8x256xf32>
    %69 = vector.extract_strided_slice %63 {offsets = [0, 128], sizes = [8, 64], strides = [1, 1]} : vector<8x256xf32> to vector<8x64xf32>
    %70 = math.tanh %69 : vector<8x64xf32>
    %71 = vector.extract_strided_slice %68 {offsets = [0, 64], sizes = [8, 64], strides = [1, 1]} : vector<8x256xf32> to vector<8x64xf32>
    %72 = arith.mulf %71, %47 : vector<8x64xf32>
    %73 = vector.extract_strided_slice %68 {offsets = [0, 0], sizes = [8, 64], strides = [1, 1]} : vector<8x256xf32> to vector<8x64xf32>
    %74 = arith.mulf %73, %70 : vector<8x64xf32>
    %75 = arith.addf %72, %74 : vector<8x64xf32>
    %76 = vector.extract_strided_slice %68 {offsets = [0, 192], sizes = [8, 64], strides = [1, 1]} : vector<8x256xf32> to vector<8x64xf32>
    %77 = math.tanh %75 : vector<8x64xf32>
    %78 = arith.mulf %76, %77 : vector<8x64xf32>
    %79 = arith.truncf %78 : vector<8x64xf32> to vector<8x64xbf16>
    %80 = vector.extract_strided_slice %79 {offsets = [0, 0], sizes = [8, 32], strides = [1, 1]} : vector<8x64xbf16> to vector<8x32xbf16>
    %c1_48 = arith.constant 1 : index
    %c0_49 = arith.constant 0 : index
    %c0_50 = arith.constant 0 : index
    %81 = vector.load %arg13[%c1_48, %c0_49, %c0_50] : memref<8x8x64xbf16, #tpu.memory_space<vmem>>, vector<1x8x32xbf16>
    %82 = vector.shape_cast %81 : vector<1x8x32xbf16> to vector<8x32xbf16>
    %83 = vector.shape_cast %80 : vector<8x32xbf16> to vector<1x8x32xbf16>
    tpu.vector_store %arg13[%c1_48, %c0_49, %c0_50], %83 {strides = array<i32>} : memref<8x8x64xbf16, #tpu.memory_space<vmem>>, vector<1x8x32xbf16>,
    %84 = vector.extract_strided_slice %79 {offsets = [0, 32], sizes = [8, 32], strides = [1, 1]} : vector<8x64xbf16> to vector<8x32xbf16>
    %c6_51 = arith.constant 6 : index
    %c0_52 = arith.constant 0 : index
    %c32_53 = arith.constant 32 : index
    %85 = vector.load %arg13[%c6_51, %c0_52, %c32_53] : memref<8x8x64xbf16, #tpu.memory_space<vmem>>, vector<1x8x32xbf16>
    %86 = vector.shape_cast %85 : vector<1x8x32xbf16> to vector<8x32xbf16>
    %87 = vector.shape_cast %84 : vector<8x32xbf16> to vector<1x8x32xbf16>
    tpu.vector_store %arg13[%c6_51, %c0_52, %c32_53], %87 {strides = array<i32>} : memref<8x8x64xbf16, #tpu.memory_space<vmem>>, vector<1x8x32xbf16>,
    %c2_54 = arith.constant 2 : index
    %c0_55 = arith.constant 0 : index
    %c0_56 = arith.constant 0 : index
    %88 = vector.load %arg12[%c2_54, %c0_55, %c0_56] : memref<8x8x256xf32, #tpu.memory_space<vmem>>, vector<1x8x256xf32>
    %89 = vector.shape_cast %88 : vector<1x8x256xf32> to vector<8x256xf32>
    %cst_57 = arith.constant dense<0.000000e+00> : vector<8x256xf32>
    %90 = tpu.matmul %79, %3, %cst_57 {dimension_numbers = #tpu.dot_dimension_numbers<[1], [0], [0], [1], [0, 0, 1, 1], [], []>} : vector<8x64xbf16>, vector<64x256xbf16>, vector<8x256xf32> -> vector<8x256xf32>
    %91 = arith.addf %89, %90 : vector<8x256xf32>
    %92 = arith.negf %91 : vector<8x256xf32>
    %93 = math.exp %92 : vector<8x256xf32>
    %cst_58 = arith.constant 1.000000e+00 : f32
    %94 = vector.broadcast %cst_58 : f32 to vector<8x256xf32>
    %95 = arith.addf %94, %93 : vector<8x256xf32>
    %96 = arith.divf %94, %95 : vector<8x256xf32>
    %97 = vector.extract_strided_slice %91 {offsets = [0, 128], sizes = [8, 64], strides = [1, 1]} : vector<8x256xf32> to vector<8x64xf32>
    %98 = math.tanh %97 : vector<8x64xf32>
    %99 = vector.extract_strided_slice %96 {offsets = [0, 64], sizes = [8, 64], strides = [1, 1]} : vector<8x256xf32> to vector<8x64xf32>
    %100 = arith.mulf %99, %75 : vector<8x64xf32>
    %101 = vector.extract_strided_slice %96 {offsets = [0, 0], sizes = [8, 64], strides = [1, 1]} : vector<8x256xf32> to vector<8x64xf32>
    %102 = arith.mulf %101, %98 : vector<8x64xf32>
    %103 = arith.addf %100, %102 : vector<8x64xf32>
    %104 = vector.extract_strided_slice %96 {offsets = [0, 192], sizes = [8, 64], strides = [1, 1]} : vector<8x256xf32> to vector<8x64xf32>
    %105 = math.tanh %103 : vector<8x64xf32>
    %106 = arith.mulf %104, %105 : vector<8x64xf32>
    %107 = arith.truncf %106 : vector<8x64xf32> to vector<8x64xbf16>
    %108 = vector.extract_strided_slice %107 {offsets = [0, 0], sizes = [8, 32], strides = [1, 1]} : vector<8x64xbf16> to vector<8x32xbf16>
    %c2_59 = arith.constant 2 : index
    %c0_60 = arith.constant 0 : index
    %c0_61 = arith.constant 0 : index
    %109 = vector.load %arg13[%c2_59, %c0_60, %c0_61] : memref<8x8x64xbf16, #tpu.memory_space<vmem>>, vector<1x8x32xbf16>
    %110 = vector.shape_cast %109 : vector<1x8x32xbf16> to vector<8x32xbf16>
    %111 = vector.shape_cast %108 : vector<8x32xbf16> to vector<1x8x32xbf16>
    tpu.vector_store %arg13[%c2_59, %c0_60, %c0_61], %111 {strides = array<i32>} : memref<8x8x64xbf16, #tpu.memory_space<vmem>>, vector<1x8x32xbf16>,
    %112 = vector.extract_strided_slice %107 {offsets = [0, 32], sizes = [8, 32], strides = [1, 1]} : vector<8x64xbf16> to vector<8x32xbf16>
    %c5_62 = arith.constant 5 : index
    %c0_63 = arith.constant 0 : index
    %c32_64 = arith.constant 32 : index
    %113 = vector.load %arg13[%c5_62, %c0_63, %c32_64] : memref<8x8x64xbf16, #tpu.memory_space<vmem>>, vector<1x8x32xbf16>
    %114 = vector.shape_cast %113 : vector<1x8x32xbf16> to vector<8x32xbf16>
    %115 = vector.shape_cast %112 : vector<8x32xbf16> to vector<1x8x32xbf16>
    tpu.vector_store %arg13[%c5_62, %c0_63, %c32_64], %115 {strides = array<i32>} : memref<8x8x64xbf16, #tpu.memory_space<vmem>>, vector<1x8x32xbf16>,
    %c3_65 = arith.constant 3 : index
    %c0_66 = arith.constant 0 : index
    %c0_67 = arith.constant 0 : index
    %116 = vector.load %arg12[%c3_65, %c0_66, %c0_67] : memref<8x8x256xf32, #tpu.memory_space<vmem>>, vector<1x8x256xf32>
    %117 = vector.shape_cast %116 : vector<1x8x256xf32> to vector<8x256xf32>
    %cst_68 = arith.constant dense<0.000000e+00> : vector<8x256xf32>
    %118 = tpu.matmul %107, %3, %cst_68 {dimension_numbers = #tpu.dot_dimension_numbers<[1], [0], [0], [1], [0, 0, 1, 1], [], []>} : vector<8x64xbf16>, vector<64x256xbf16>, vector<8x256xf32> -> vector<8x256xf32>
    %119 = arith.addf %117, %118 : vector<8x256xf32>
    %120 = arith.negf %119 : vector<8x256xf32>
    %121 = math.exp %120 : vector<8x256xf32>
    %cst_69 = arith.constant 1.000000e+00 : f32
    %122 = vector.broadcast %cst_69 : f32 to vector<8x256xf32>
    %123 = arith.addf %122, %121 : vector<8x256xf32>
    %124 = arith.divf %122, %123 : vector<8x256xf32>
    %125 = vector.extract_strided_slice %119 {offsets = [0, 128], sizes = [8, 64], strides = [1, 1]} : vector<8x256xf32> to vector<8x64xf32>
    %126 = math.tanh %125 : vector<8x64xf32>
    %127 = vector.extract_strided_slice %124 {offsets = [0, 64], sizes = [8, 64], strides = [1, 1]} : vector<8x256xf32> to vector<8x64xf32>
    %128 = arith.mulf %127, %103 : vector<8x64xf32>
    %129 = vector.extract_strided_slice %124 {offsets = [0, 0], sizes = [8, 64], strides = [1, 1]} : vector<8x256xf32> to vector<8x64xf32>
    %130 = arith.mulf %129, %126 : vector<8x64xf32>
    %131 = arith.addf %128, %130 : vector<8x64xf32>
    %132 = vector.extract_strided_slice %124 {offsets = [0, 192], sizes = [8, 64], strides = [1, 1]} : vector<8x256xf32> to vector<8x64xf32>
    %133 = math.tanh %131 : vector<8x64xf32>
    %134 = arith.mulf %132, %133 : vector<8x64xf32>
    %135 = arith.truncf %134 : vector<8x64xf32> to vector<8x64xbf16>
    %136 = vector.extract_strided_slice %135 {offsets = [0, 0], sizes = [8, 32], strides = [1, 1]} : vector<8x64xbf16> to vector<8x32xbf16>
    %c3_70 = arith.constant 3 : index
    %c0_71 = arith.constant 0 : index
    %c0_72 = arith.constant 0 : index
    %137 = vector.load %arg13[%c3_70, %c0_71, %c0_72] : memref<8x8x64xbf16, #tpu.memory_space<vmem>>, vector<1x8x32xbf16>
    %138 = vector.shape_cast %137 : vector<1x8x32xbf16> to vector<8x32xbf16>
    %139 = vector.shape_cast %136 : vector<8x32xbf16> to vector<1x8x32xbf16>
    tpu.vector_store %arg13[%c3_70, %c0_71, %c0_72], %139 {strides = array<i32>} : memref<8x8x64xbf16, #tpu.memory_space<vmem>>, vector<1x8x32xbf16>,
    %140 = vector.extract_strided_slice %135 {offsets = [0, 32], sizes = [8, 32], strides = [1, 1]} : vector<8x64xbf16> to vector<8x32xbf16>
    %c4_73 = arith.constant 4 : index
    %c0_74 = arith.constant 0 : index
    %c32_75 = arith.constant 32 : index
    %141 = vector.load %arg13[%c4_73, %c0_74, %c32_75] : memref<8x8x64xbf16, #tpu.memory_space<vmem>>, vector<1x8x32xbf16>
    %142 = vector.shape_cast %141 : vector<1x8x32xbf16> to vector<8x32xbf16>
    %143 = vector.shape_cast %140 : vector<8x32xbf16> to vector<1x8x32xbf16>
    tpu.vector_store %arg13[%c4_73, %c0_74, %c32_75], %143 {strides = array<i32>} : memref<8x8x64xbf16, #tpu.memory_space<vmem>>, vector<1x8x32xbf16>,
    %c4_76 = arith.constant 4 : index
    %c0_77 = arith.constant 0 : index
    %c0_78 = arith.constant 0 : index
    %144 = vector.load %arg12[%c4_76, %c0_77, %c0_78] : memref<8x8x256xf32, #tpu.memory_space<vmem>>, vector<1x8x256xf32>
    %145 = vector.shape_cast %144 : vector<1x8x256xf32> to vector<8x256xf32>
    %cst_79 = arith.constant dense<0.000000e+00> : vector<8x256xf32>
    %146 = tpu.matmul %135, %3, %cst_79 {dimension_numbers = #tpu.dot_dimension_numbers<[1], [0], [0], [1], [0, 0, 1, 1], [], []>} : vector<8x64xbf16>, vector<64x256xbf16>, vector<8x256xf32> -> vector<8x256xf32>
    %147 = arith.addf %145, %146 : vector<8x256xf32>
    %148 = arith.negf %147 : vector<8x256xf32>
    %149 = math.exp %148 : vector<8x256xf32>
    %cst_80 = arith.constant 1.000000e+00 : f32
    %150 = vector.broadcast %cst_80 : f32 to vector<8x256xf32>
    %151 = arith.addf %150, %149 : vector<8x256xf32>
    %152 = arith.divf %150, %151 : vector<8x256xf32>
    %153 = vector.extract_strided_slice %147 {offsets = [0, 128], sizes = [8, 64], strides = [1, 1]} : vector<8x256xf32> to vector<8x64xf32>
    %154 = math.tanh %153 : vector<8x64xf32>
    %155 = vector.extract_strided_slice %152 {offsets = [0, 64], sizes = [8, 64], strides = [1, 1]} : vector<8x256xf32> to vector<8x64xf32>
    %156 = arith.mulf %155, %131 : vector<8x64xf32>
    %157 = vector.extract_strided_slice %152 {offsets = [0, 0], sizes = [8, 64], strides = [1, 1]} : vector<8x256xf32> to vector<8x64xf32>
    %158 = arith.mulf %157, %154 : vector<8x64xf32>
    %159 = arith.addf %156, %158 : vector<8x64xf32>
    %160 = vector.extract_strided_slice %152 {offsets = [0, 192], sizes = [8, 64], strides = [1, 1]} : vector<8x256xf32> to vector<8x64xf32>
    %161 = math.tanh %159 : vector<8x64xf32>
    %162 = arith.mulf %160, %161 : vector<8x64xf32>
    %163 = arith.truncf %162 : vector<8x64xf32> to vector<8x64xbf16>
    %164 = vector.extract_strided_slice %163 {offsets = [0, 0], sizes = [8, 32], strides = [1, 1]} : vector<8x64xbf16> to vector<8x32xbf16>
    %c4_81 = arith.constant 4 : index
    %c0_82 = arith.constant 0 : index
    %c0_83 = arith.constant 0 : index
    %165 = vector.load %arg13[%c4_81, %c0_82, %c0_83] : memref<8x8x64xbf16, #tpu.memory_space<vmem>>, vector<1x8x32xbf16>
    %166 = vector.shape_cast %165 : vector<1x8x32xbf16> to vector<8x32xbf16>
    %167 = vector.shape_cast %164 : vector<8x32xbf16> to vector<1x8x32xbf16>
    tpu.vector_store %arg13[%c4_81, %c0_82, %c0_83], %167 {strides = array<i32>} : memref<8x8x64xbf16, #tpu.memory_space<vmem>>, vector<1x8x32xbf16>,
    %168 = vector.extract_strided_slice %163 {offsets = [0, 32], sizes = [8, 32], strides = [1, 1]} : vector<8x64xbf16> to vector<8x32xbf16>
    %c3_84 = arith.constant 3 : index
    %c0_85 = arith.constant 0 : index
    %c32_86 = arith.constant 32 : index
    %169 = vector.load %arg13[%c3_84, %c0_85, %c32_86] : memref<8x8x64xbf16, #tpu.memory_space<vmem>>, vector<1x8x32xbf16>
    %170 = vector.shape_cast %169 : vector<1x8x32xbf16> to vector<8x32xbf16>
    %171 = vector.shape_cast %168 : vector<8x32xbf16> to vector<1x8x32xbf16>
    tpu.vector_store %arg13[%c3_84, %c0_85, %c32_86], %171 {strides = array<i32>} : memref<8x8x64xbf16, #tpu.memory_space<vmem>>, vector<1x8x32xbf16>,
    %c5_87 = arith.constant 5 : index
    %c0_88 = arith.constant 0 : index
    %c0_89 = arith.constant 0 : index
    %172 = vector.load %arg12[%c5_87, %c0_88, %c0_89] : memref<8x8x256xf32, #tpu.memory_space<vmem>>, vector<1x8x256xf32>
    %173 = vector.shape_cast %172 : vector<1x8x256xf32> to vector<8x256xf32>
    %cst_90 = arith.constant dense<0.000000e+00> : vector<8x256xf32>
    %174 = tpu.matmul %163, %3, %cst_90 {dimension_numbers = #tpu.dot_dimension_numbers<[1], [0], [0], [1], [0, 0, 1, 1], [], []>} : vector<8x64xbf16>, vector<64x256xbf16>, vector<8x256xf32> -> vector<8x256xf32>
    %175 = arith.addf %173, %174 : vector<8x256xf32>
    %176 = arith.negf %175 : vector<8x256xf32>
    %177 = math.exp %176 : vector<8x256xf32>
    %cst_91 = arith.constant 1.000000e+00 : f32
    %178 = vector.broadcast %cst_91 : f32 to vector<8x256xf32>
    %179 = arith.addf %178, %177 : vector<8x256xf32>
    %180 = arith.divf %178, %179 : vector<8x256xf32>
    %181 = vector.extract_strided_slice %175 {offsets = [0, 128], sizes = [8, 64], strides = [1, 1]} : vector<8x256xf32> to vector<8x64xf32>
    %182 = math.tanh %181 : vector<8x64xf32>
    %183 = vector.extract_strided_slice %180 {offsets = [0, 64], sizes = [8, 64], strides = [1, 1]} : vector<8x256xf32> to vector<8x64xf32>
    %184 = arith.mulf %183, %159 : vector<8x64xf32>
    %185 = vector.extract_strided_slice %180 {offsets = [0, 0], sizes = [8, 64], strides = [1, 1]} : vector<8x256xf32> to vector<8x64xf32>
    %186 = arith.mulf %185, %182 : vector<8x64xf32>
    %187 = arith.addf %184, %186 : vector<8x64xf32>
    %188 = vector.extract_strided_slice %180 {offsets = [0, 192], sizes = [8, 64], strides = [1, 1]} : vector<8x256xf32> to vector<8x64xf32>
    %189 = math.tanh %187 : vector<8x64xf32>
    %190 = arith.mulf %188, %189 : vector<8x64xf32>
    %191 = arith.truncf %190 : vector<8x64xf32> to vector<8x64xbf16>
    %192 = vector.extract_strided_slice %191 {offsets = [0, 0], sizes = [8, 32], strides = [1, 1]} : vector<8x64xbf16> to vector<8x32xbf16>
    %c5_92 = arith.constant 5 : index
    %c0_93 = arith.constant 0 : index
    %c0_94 = arith.constant 0 : index
    %193 = vector.load %arg13[%c5_92, %c0_93, %c0_94] : memref<8x8x64xbf16, #tpu.memory_space<vmem>>, vector<1x8x32xbf16>
    %194 = vector.shape_cast %193 : vector<1x8x32xbf16> to vector<8x32xbf16>
    %195 = vector.shape_cast %192 : vector<8x32xbf16> to vector<1x8x32xbf16>
    tpu.vector_store %arg13[%c5_92, %c0_93, %c0_94], %195 {strides = array<i32>} : memref<8x8x64xbf16, #tpu.memory_space<vmem>>, vector<1x8x32xbf16>,
    %196 = vector.extract_strided_slice %191 {offsets = [0, 32], sizes = [8, 32], strides = [1, 1]} : vector<8x64xbf16> to vector<8x32xbf16>
    %c2_95 = arith.constant 2 : index
    %c0_96 = arith.constant 0 : index
    %c32_97 = arith.constant 32 : index
    %197 = vector.load %arg13[%c2_95, %c0_96, %c32_97] : memref<8x8x64xbf16, #tpu.memory_space<vmem>>, vector<1x8x32xbf16>
    %198 = vector.shape_cast %197 : vector<1x8x32xbf16> to vector<8x32xbf16>
    %199 = vector.shape_cast %196 : vector<8x32xbf16> to vector<1x8x32xbf16>
    tpu.vector_store %arg13[%c2_95, %c0_96, %c32_97], %199 {strides = array<i32>} : memref<8x8x64xbf16, #tpu.memory_space<vmem>>, vector<1x8x32xbf16>,
    %c6_98 = arith.constant 6 : index
    %c0_99 = arith.constant 0 : index
    %c0_100 = arith.constant 0 : index
    %200 = vector.load %arg12[%c6_98, %c0_99, %c0_100] : memref<8x8x256xf32, #tpu.memory_space<vmem>>, vector<1x8x256xf32>
    %201 = vector.shape_cast %200 : vector<1x8x256xf32> to vector<8x256xf32>
    %cst_101 = arith.constant dense<0.000000e+00> : vector<8x256xf32>
    %202 = tpu.matmul %191, %3, %cst_101 {dimension_numbers = #tpu.dot_dimension_numbers<[1], [0], [0], [1], [0, 0, 1, 1], [], []>} : vector<8x64xbf16>, vector<64x256xbf16>, vector<8x256xf32> -> vector<8x256xf32>
    %203 = arith.addf %201, %202 : vector<8x256xf32>
    %204 = arith.negf %203 : vector<8x256xf32>
    %205 = math.exp %204 : vector<8x256xf32>
    %cst_102 = arith.constant 1.000000e+00 : f32
    %206 = vector.broadcast %cst_102 : f32 to vector<8x256xf32>
    %207 = arith.addf %206, %205 : vector<8x256xf32>
    %208 = arith.divf %206, %207 : vector<8x256xf32>
    %209 = vector.extract_strided_slice %203 {offsets = [0, 128], sizes = [8, 64], strides = [1, 1]} : vector<8x256xf32> to vector<8x64xf32>
    %210 = math.tanh %209 : vector<8x64xf32>
    %211 = vector.extract_strided_slice %208 {offsets = [0, 64], sizes = [8, 64], strides = [1, 1]} : vector<8x256xf32> to vector<8x64xf32>
    %212 = arith.mulf %211, %187 : vector<8x64xf32>
    %213 = vector.extract_strided_slice %208 {offsets = [0, 0], sizes = [8, 64], strides = [1, 1]} : vector<8x256xf32> to vector<8x64xf32>
    %214 = arith.mulf %213, %210 : vector<8x64xf32>
    %215 = arith.addf %212, %214 : vector<8x64xf32>
    %216 = vector.extract_strided_slice %208 {offsets = [0, 192], sizes = [8, 64], strides = [1, 1]} : vector<8x256xf32> to vector<8x64xf32>
    %217 = math.tanh %215 : vector<8x64xf32>
    %218 = arith.mulf %216, %217 : vector<8x64xf32>
    %219 = arith.truncf %218 : vector<8x64xf32> to vector<8x64xbf16>
    %220 = vector.extract_strided_slice %219 {offsets = [0, 0], sizes = [8, 32], strides = [1, 1]} : vector<8x64xbf16> to vector<8x32xbf16>
    %c6_103 = arith.constant 6 : index
    %c0_104 = arith.constant 0 : index
    %c0_105 = arith.constant 0 : index
    %221 = vector.load %arg13[%c6_103, %c0_104, %c0_105] : memref<8x8x64xbf16, #tpu.memory_space<vmem>>, vector<1x8x32xbf16>
    %222 = vector.shape_cast %221 : vector<1x8x32xbf16> to vector<8x32xbf16>
    %223 = vector.shape_cast %220 : vector<8x32xbf16> to vector<1x8x32xbf16>
    tpu.vector_store %arg13[%c6_103, %c0_104, %c0_105], %223 {strides = array<i32>} : memref<8x8x64xbf16, #tpu.memory_space<vmem>>, vector<1x8x32xbf16>,
    %224 = vector.extract_strided_slice %219 {offsets = [0, 32], sizes = [8, 32], strides = [1, 1]} : vector<8x64xbf16> to vector<8x32xbf16>
    %c1_106 = arith.constant 1 : index
    %c0_107 = arith.constant 0 : index
    %c32_108 = arith.constant 32 : index
    %225 = vector.load %arg13[%c1_106, %c0_107, %c32_108] : memref<8x8x64xbf16, #tpu.memory_space<vmem>>, vector<1x8x32xbf16>
    %226 = vector.shape_cast %225 : vector<1x8x32xbf16> to vector<8x32xbf16>
    %227 = vector.shape_cast %224 : vector<8x32xbf16> to vector<1x8x32xbf16>
    tpu.vector_store %arg13[%c1_106, %c0_107, %c32_108], %227 {strides = array<i32>} : memref<8x8x64xbf16, #tpu.memory_space<vmem>>, vector<1x8x32xbf16>,
    %c7_109 = arith.constant 7 : index
    %c0_110 = arith.constant 0 : index
    %c0_111 = arith.constant 0 : index
    %228 = vector.load %arg12[%c7_109, %c0_110, %c0_111] : memref<8x8x256xf32, #tpu.memory_space<vmem>>, vector<1x8x256xf32>
    %229 = vector.shape_cast %228 : vector<1x8x256xf32> to vector<8x256xf32>
    %cst_112 = arith.constant dense<0.000000e+00> : vector<8x256xf32>
    %230 = tpu.matmul %219, %3, %cst_112 {dimension_numbers = #tpu.dot_dimension_numbers<[1], [0], [0], [1], [0, 0, 1, 1], [], []>} : vector<8x64xbf16>, vector<64x256xbf16>, vector<8x256xf32> -> vector<8x256xf32>
    %231 = arith.addf %229, %230 : vector<8x256xf32>
    %232 = arith.negf %231 : vector<8x256xf32>
    %233 = math.exp %232 : vector<8x256xf32>
    %cst_113 = arith.constant 1.000000e+00 : f32
    %234 = vector.broadcast %cst_113 : f32 to vector<8x256xf32>
    %235 = arith.addf %234, %233 : vector<8x256xf32>
    %236 = arith.divf %234, %235 : vector<8x256xf32>
    %237 = vector.extract_strided_slice %231 {offsets = [0, 128], sizes = [8, 64], strides = [1, 1]} : vector<8x256xf32> to vector<8x64xf32>
    %238 = math.tanh %237 : vector<8x64xf32>
    %239 = vector.extract_strided_slice %236 {offsets = [0, 64], sizes = [8, 64], strides = [1, 1]} : vector<8x256xf32> to vector<8x64xf32>
    %240 = arith.mulf %239, %215 : vector<8x64xf32>
    %241 = vector.extract_strided_slice %236 {offsets = [0, 0], sizes = [8, 64], strides = [1, 1]} : vector<8x256xf32> to vector<8x64xf32>
    %242 = arith.mulf %241, %238 : vector<8x64xf32>
    %243 = arith.addf %240, %242 : vector<8x64xf32>
    %244 = vector.extract_strided_slice %236 {offsets = [0, 192], sizes = [8, 64], strides = [1, 1]} : vector<8x256xf32> to vector<8x64xf32>
    %245 = math.tanh %243 : vector<8x64xf32>
    %246 = arith.mulf %244, %245 : vector<8x64xf32>
    %247 = arith.truncf %246 : vector<8x64xf32> to vector<8x64xbf16>
    %248 = vector.extract_strided_slice %247 {offsets = [0, 0], sizes = [8, 32], strides = [1, 1]} : vector<8x64xbf16> to vector<8x32xbf16>
    %c7_114 = arith.constant 7 : index
    %c0_115 = arith.constant 0 : index
    %c0_116 = arith.constant 0 : index
    %249 = vector.load %arg13[%c7_114, %c0_115, %c0_116] : memref<8x8x64xbf16, #tpu.memory_space<vmem>>, vector<1x8x32xbf16>
    %250 = vector.shape_cast %249 : vector<1x8x32xbf16> to vector<8x32xbf16>
    %251 = vector.shape_cast %248 : vector<8x32xbf16> to vector<1x8x32xbf16>
    tpu.vector_store %arg13[%c7_114, %c0_115, %c0_116], %251 {strides = array<i32>} : memref<8x8x64xbf16, #tpu.memory_space<vmem>>, vector<1x8x32xbf16>,
    %252 = vector.extract_strided_slice %247 {offsets = [0, 32], sizes = [8, 32], strides = [1, 1]} : vector<8x64xbf16> to vector<8x32xbf16>
    %c0_117 = arith.constant 0 : index
    %c0_118 = arith.constant 0 : index
    %c32_119 = arith.constant 32 : index
    %253 = vector.load %arg13[%c0_117, %c0_118, %c32_119] : memref<8x8x64xbf16, #tpu.memory_space<vmem>>, vector<1x8x32xbf16>
    %254 = vector.shape_cast %253 : vector<1x8x32xbf16> to vector<8x32xbf16>
    %255 = vector.shape_cast %252 : vector<8x32xbf16> to vector<1x8x32xbf16>
    tpu.vector_store %arg13[%c0_117, %c0_118, %c32_119], %255 {strides = array<i32>} : memref<8x8x64xbf16, #tpu.memory_space<vmem>>, vector<1x8x32xbf16>,
    %c0_120 = arith.constant 0 : index
    %c0_121 = arith.constant 0 : index
    %256 = vector.load %arg6[%c0_120, %c0_121] : memref<32x32xbf16, #tpu.memory_space<vmem>>, vector<32x32xbf16>
    %c0_122 = arith.constant 0 : index
    %c0_123 = arith.constant 0 : index
    %257 = vector.load %arg7[%c0_122, %c0_123] : memref<64x32xbf16, #tpu.memory_space<vmem>>, vector<64x32xbf16>
    %c0_124 = arith.constant 0 : index
    %c0_125 = arith.constant 0 : index
    %258 = vector.load %arg8[%c0_124, %c0_125] : memref<1x32xf32, #tpu.memory_space<vmem>>, vector<1x32xf32>
    %cst_126 = arith.constant 0xFF800000 : f32
    %259 = vector.broadcast %cst_126 : f32 to vector<8x32xf32>
    %c0_127 = arith.constant 0 : index
    %c0_128 = arith.constant 0 : index
    %c0_129 = arith.constant 0 : index
    %260 = vector.load %arg1[%c0_127, %c0_128, %c0_129] : memref<8x8x32xbf16, #tpu.memory_space<vmem>>, vector<8x8x32xbf16>
    %261 = vector.shape_cast %260 : vector<8x8x32xbf16> to vector<64x32xbf16>
    %c0_130 = arith.constant 0 : index
    %c0_131 = arith.constant 0 : index
    %c0_132 = arith.constant 0 : index
    %262 = vector.load %arg13[%c0_130, %c0_131, %c0_132] : memref<8x8x64xbf16, #tpu.memory_space<vmem>>, vector<8x8x64xbf16>
    %263 = vector.shape_cast %262 : vector<8x8x64xbf16> to vector<64x64xbf16>
    %cst_133 = arith.constant dense<0.000000e+00> : vector<64x32xf32>
    %264 = tpu.matmul %261, %256, %cst_133 {dimension_numbers = #tpu.dot_dimension_numbers<[1], [0], [0], [1], [0, 0, 1, 1], [], []>} : vector<64x32xbf16>, vector<32x32xbf16>, vector<64x32xf32> -> vector<64x32xf32>
    %cst_134 = arith.constant dense<0.000000e+00> : vector<64x32xf32>
    %265 = tpu.matmul %263, %257, %cst_134 {dimension_numbers = #tpu.dot_dimension_numbers<[1], [0], [0], [1], [0, 0, 1, 1], [], []>} : vector<64x64xbf16>, vector<64x32xbf16>, vector<64x32xf32> -> vector<64x32xf32>
    %266 = arith.addf %264, %265 : vector<64x32xf32>
    %267 = vector.broadcast %258 : vector<1x32xf32> to vector<64x32xf32>
    %268 = arith.addf %266, %267 : vector<64x32xf32>
    %269 = math.tanh %268 : vector<64x32xf32>
    %270 = vector.shape_cast %269 : vector<64x32xf32> to vector<8x8x32xf32>
    %cst_135 = arith.constant dense<0xFF800000> : vector<8x32xf32>
    %271 = vector.multi_reduction <maximumf>, %270, %cst_135 [0] : vector<8x8x32xf32> to vector<8x32xf32>
    %272 = arith.maximumf %259, %271 : vector<8x32xf32>
    %273 = arith.truncf %272 : vector<8x32xf32> to vector<8x32xbf16>
    %c0_136 = arith.constant 0 : index
    %c0_137 = arith.constant 0 : index
    %274 = vector.load %arg9[%c0_136, %c0_137] : memref<32x128xbf16, #tpu.memory_space<vmem>>, vector<32x128xbf16>
    %cst_138 = arith.constant dense<0.000000e+00> : vector<8x128xf32>
    %275 = tpu.matmul %273, %274, %cst_138 {dimension_numbers = #tpu.dot_dimension_numbers<[1], [0], [0], [1], [0, 0, 1, 1], [], []>} : vector<8x32xbf16>, vector<32x128xbf16>, vector<8x128xf32> -> vector<8x128xf32>
    %c0_139 = arith.constant 0 : index
    %c0_140 = arith.constant 0 : index
    %276 = vector.load %arg10[%c0_139, %c0_140] : memref<1x128xf32, #tpu.memory_space<vmem>>, vector<1x128xf32>
    %277 = vector.broadcast %276 : vector<1x128xf32> to vector<8x128xf32>
    %278 = arith.addf %275, %277 : vector<8x128xf32>
    %c0_141 = arith.constant 0 : index
    %c0_142 = arith.constant 0 : index
    %279 = vector.load %arg11[%c0_141, %c0_142] : memref<8x128xf32, #tpu.memory_space<vmem>>, vector<8x128xf32>
    tpu.vector_store %arg11[%c0_141, %c0_142], %278 {strides = array<i32>} : memref<8x128xf32, #tpu.memory_space<vmem>>, vector<8x128xf32>,
    return
  }
  func.func @transform_0(%arg0: i32) -> (i32, i32, i32) {
    %c0_i32 = arith.constant 0 : i32
    %c0_i32_0 = arith.constant 0 : i32
    %c0_i32_1 = arith.constant 0 : i32
    return %c0_i32, %arg0, %c0_i32_0 : i32, i32, i32
  }
  func.func @transform_1(%arg0: i32) -> (i32, i32) {
    %c0_i32 = arith.constant 0 : i32
    %c0_i32_0 = arith.constant 0 : i32
    %c0_i32_1 = arith.constant 0 : i32
    return %c0_i32, %c0_i32_0 : i32, i32
  }
  func.func @transform_2(%arg0: i32) -> (i32, i32) {
    %c0_i32 = arith.constant 0 : i32
    %c0_i32_0 = arith.constant 0 : i32
    %c0_i32_1 = arith.constant 0 : i32
    return %c0_i32, %c0_i32_0 : i32, i32
  }
  func.func @transform_3(%arg0: i32) -> (i32, i32) {
    %c0_i32 = arith.constant 0 : i32
    %c0_i32_0 = arith.constant 0 : i32
    %c0_i32_1 = arith.constant 0 : i32
    return %c0_i32, %c0_i32_0 : i32, i32
  }
  func.func @transform_4(%arg0: i32) -> (i32, i32) {
    %c0_i32 = arith.constant 0 : i32
    %c0_i32_0 = arith.constant 0 : i32
    %c0_i32_1 = arith.constant 0 : i32
    return %c0_i32, %c0_i32_0 : i32, i32
  }
  func.func @transform_5(%arg0: i32) -> (i32, i32) {
    %c0_i32 = arith.constant 0 : i32
    %c0_i32_0 = arith.constant 0 : i32
    %c0_i32_1 = arith.constant 0 : i32
    return %c0_i32, %c0_i32_0 : i32, i32
  }
  func.func @transform_6(%arg0: i32) -> (i32, i32) {
    %c0_i32 = arith.constant 0 : i32
    %c0_i32_0 = arith.constant 0 : i32
    %c0_i32_1 = arith.constant 0 : i32
    return %c0_i32, %c0_i32_0 : i32, i32
  }
  func.func @transform_7(%arg0: i32) -> (i32, i32) {
    %c0_i32 = arith.constant 0 : i32
    %c0_i32_0 = arith.constant 0 : i32
    %c0_i32_1 = arith.constant 0 : i32
    return %c0_i32, %c0_i32_0 : i32, i32
  }
  func.func @transform_8(%arg0: i32) -> (i32, i32) {
    %c0_i32 = arith.constant 0 : i32
    %c0_i32_0 = arith.constant 0 : i32
    %c0_i32_1 = arith.constant 0 : i32
    return %c0_i32, %c0_i32_0 : i32, i32
  }
  func.func @transform_9(%arg0: i32) -> (i32, i32) {
    %c0_i32 = arith.constant 0 : i32
    %c0_i32_0 = arith.constant 0 : i32
    %c0_i32_1 = arith.constant 0 : i32
    return %c0_i32, %c0_i32_0 : i32, i32
  }
  func.func @transform_10(%arg0: i32) -> (i32, i32) {
    %c0_i32 = arith.constant 0 : i32
    %c0_i32_0 = arith.constant 0 : i32
    return %arg0, %c0_i32 : i32, i32
  }
}

</mosaic_0001>

<llo_original>
// kernel: tpu_custom_call.1
$region0: #{tpu_custom_call.1}
  #allocation0 [shape = 'u32[]', space=smem, size = 0x4, offset = 0x4, fixed_abs, tag = 'smem constant byte address 0x4 - core index']
  #allocation1 [shape = 'u32[144,128]{1,0:T(1,128)}', space=vmem, size = 0x12000, scoped, tag = 'internal scratch']
  #allocation2 [shape = 'f32[8,8,256]{2,1,0:T(8,128)}', space=vmem, size = 0x10000, scoped, tag = 'scratch operand']
  #allocation3 [shape = 'bf16[8,8,64]{2,1,0:T(8,128)(2,1)}', space=vmem, size = 0x4000, scoped, tag = 'scratch operand']
  %s0 = inlined_call_operand.vmem [shape: bf16[8,8,32], index: 0, kind: input, shape index: {}]
  %s1 = inlined_call_operand.hbm [shape: bf16[32,256], index: 1, kind: input, shape index: {}]
  %s2 = inlined_call_operand.hbm [shape: bf16[32,256], index: 2, kind: input, shape index: {}]
  %s3 = inlined_call_operand.vmem [shape: f32[1,256], index: 3, kind: input, shape index: {}]
  %s4 = inlined_call_operand.hbm [shape: bf16[64,256], index: 4, kind: input, shape index: {}]
  %s5 = inlined_call_operand.vmem [shape: bf16[32,32], index: 5, kind: input, shape index: {}]
  %s6 = inlined_call_operand.vmem [shape: bf16[64,32], index: 6, kind: input, shape index: {}]
  %s7 = inlined_call_operand.vmem [shape: f32[1,32], index: 7, kind: input, shape index: {}]
  %s8 = inlined_call_operand.hbm [shape: bf16[32,128], index: 8, kind: input, shape index: {}]
  %s9 = inlined_call_operand.vmem [shape: f32[1,128], index: 9, kind: input, shape index: {}]
  %s10 = inlined_call_operand.hbm [shape: f32[8,128], index: 10, kind: output, shape index: {}]
  %s11 = sld [smem:[#allocation0]]
  $region66: #{tpu_custom_call.1} parent=0
    _
  %s13 = ssub.s32 1, %s11
  %s14 = scalar_select 0, %s13, %s11
  $region1: #{tpu_custom_call.1} parent=0
    #allocation4 [shape = 'u8[16384]{0}', space=vmem, size = 0x4000, scoped, tag = 'input window, operand 1, single buffered']
    #allocation5 [shape = 's32[1]{0}', space=sflag, size = 0x4, scoped, tag = 'scoped memory for tpu_custom_call.1']
    #allocation6 [shape = 's32[1]{0}', space=sflag, size = 0x4, scoped, tag = 'scoped memory for tpu_custom_call.1']
    #allocation7 [shape = 'u8[16384]{0}', space=vmem, size = 0x4000, scoped, tag = 'input window, operand 2, single buffered']
    #allocation8 [shape = 's32[1]{0}', space=sflag, size = 0x4, scoped, tag = 'scoped memory for tpu_custom_call.1']
    #allocation9 [shape = 'u8[32768]{0}', space=vmem, size = 0x8000, scoped, tag = 'input window, operand 4, single buffered']
    #allocation10 [shape = 'u8[8192]{0}', space=vmem, size = 0x2000, scoped, tag = 'input window, operand 8, single buffered']
    #allocation11 [shape = 's32[1]{0}', space=sflag, size = 0x4, scoped, tag = 'scoped memory for tpu_custom_call.1']
    #allocation12 [shape = 'u8[4096]{0}', space=vmem, size = 0x1000, scoped, tag = 'output window, operand 0, single buffered']
    %15 = vsyncpa [#allocation5], 0
    %16 = vsyncpa [#allocation8], 0
    %17 = vsyncpa [#allocation11], 0
    %18 = vsyncpa [#allocation6], 0
    // Predicated region
    $region2: #{tpu_custom_call.1} parent=1 // pred_check
      _
    $region3: #{tpu_custom_call.1} parent=1 // pred_check_branch
      %20 = sbr.rel (0) target = $region5
    $region4: #{tpu_custom_call.1} parent=1 // pred_region
      _
    $region5: #{tpu_custom_call.1} parent=1 // pred_fallthru
      _
    // Predicated region
    $region6: #{tpu_custom_call.1} parent=1 // pred_check
      _
    $region7: #{tpu_custom_call.1} parent=1 // pred_check_branch
      %22 = sbr.rel (0) target = $region9
    $region8: #{tpu_custom_call.1} parent=1 // pred_region
      %s24 = ssub.s32 512, 512
      %25 = vsyncadd [#allocation5], %s24
      %s26 = sshll.u32 [#allocation4], 4
      %s27 = int_to_ptr.vmem [resolvable:$true] %s26
      %32 = dma.hbm_to_vmem [thread:$0]  %s1, 512, %s27, [#allocation5], 128, 128, 8
    $region9: #{tpu_custom_call.1} parent=1 // pred_fallthru
      _
    // Predicated region
    $region10: #{tpu_custom_call.1} parent=1 // pred_check
      _
    $region11: #{tpu_custom_call.1} parent=1 // pred_check_branch
      %34 = sbr.rel (0) target = $region13
    $region12: #{tpu_custom_call.1} parent=1 // pred_region
      %s36 = ssub.s32 512, 512
      %37 = vsyncadd [#allocation8], %s36
      %s38 = sshll.u32 [#allocation7], 4
      %s39 = int_to_ptr.vmem [resolvable:$true] %s38
      %44 = dma.hbm_to_vmem [thread:$0]  %s2, 512, %s39, [#allocation8], 128, 128, 8
    $region13: #{tpu_custom_call.1} parent=1 // pred_fallthru
      _
    // Predicated region
    $region14: #{tpu_custom_call.1} parent=1 // pred_check
      _
    $region15: #{tpu_custom_call.1} parent=1 // pred_check_branch
      %46 = sbr.rel (0) target = $region17
    $region16: #{tpu_custom_call.1} parent=1 // pred_region
      _
    $region17: #{tpu_custom_call.1} parent=1 // pred_fallthru
      _
    // Predicated region
    $region18: #{tpu_custom_call.1} parent=1 // pred_check
      _
    $region19: #{tpu_custom_call.1} parent=1 // pred_check_branch
      %48 = sbr.rel (0) target = $region21
    $region20: #{tpu_custom_call.1} parent=1 // pred_region
      %s50 = ssub.s32 1024, 1024
      %51 = vsyncadd [#allocation8], %s50
      %s52 = sshll.u32 [#allocation9], 4
      %s53 = int_to_ptr.vmem [resolvable:$true] %s52
      %58 = dma.hbm_to_vmem [thread:$0]  %s4, 1024, %s53, [#allocation8], 128, 128, 8
    $region21: #{tpu_custom_call.1} parent=1 // pred_fallthru
      _
    // Predicated region
    $region22: #{tpu_custom_call.1} parent=1 // pred_check
      _
    $region23: #{tpu_custom_call.1} parent=1 // pred_check_branch
      %60 = sbr.rel (0) target = $region25
    $region24: #{tpu_custom_call.1} parent=1 // pred_region
      _
    $region25: #{tpu_custom_call.1} parent=1 // pred_fallthru
      _
    // Predicated region
    $region26: #{tpu_custom_call.1} parent=1 // pred_check
      _
    $region27: #{tpu_custom_call.1} parent=1 // pred_check_branch
      %62 = sbr.rel (0) target = $region29
    $region28: #{tpu_custom_call.1} parent=1 // pred_region
      _
    $region29: #{tpu_custom_call.1} parent=1 // pred_fallthru
      _
    // Predicated region
    $region30: #{tpu_custom_call.1} parent=1 // pred_check
      _
    $region31: #{tpu_custom_call.1} parent=1 // pred_check_branch
      %64 = sbr.rel (0) target = $region33
    $region32: #{tpu_custom_call.1} parent=1 // pred_region
      _
    $region33: #{tpu_custom_call.1} parent=1 // pred_fallthru
      _
    // Predicated region
    $region34: #{tpu_custom_call.1} parent=1 // pred_check
      _
    $region35: #{tpu_custom_call.1} parent=1 // pred_check_branch
      %66 = sbr.rel (0) target = $region37
    $region36: #{tpu_custom_call.1} parent=1 // pred_region
      %s68 = ssub.s32 256, 256
      %69 = vsyncadd [#allocation11], %s68
      %s70 = sshll.u32 [#allocation10], 4
      %s71 = int_to_ptr.vmem [resolvable:$true] %s70
      %76 = dma.hbm_to_vmem [thread:$0]  %s8, 256, %s71, [#allocation11], 64, 64, 4
    $region37: #{tpu_custom_call.1} parent=1 // pred_fallthru
      _
    // Predicated region
    $region38: #{tpu_custom_call.1} parent=1 // pred_check
      _
    $region39: #{tpu_custom_call.1} parent=1 // pred_check_branch
      %78 = sbr.rel (0) target = $region41
    $region40: #{tpu_custom_call.1} parent=1 // pred_region
      _
    $region41: #{tpu_custom_call.1} parent=1 // pred_fallthru
      _
    // Predicated region
    $region42: #{tpu_custom_call.1} parent=1 // pred_check
      _
    $region43: #{tpu_custom_call.1} parent=1 // pred_check_branch
      %80 = sbr.rel (0) target = $region45
    $region44: #{tpu_custom_call.1} parent=1 // pred_region
      %81 = dma.done [#allocation5], 512
    $region45: #{tpu_custom_call.1} parent=1 // pred_fallthru
      _
    // Predicated region
    $region46: #{tpu_custom_call.1} parent=1 // pred_check
      _
    $region47: #{tpu_custom_call.1} parent=1 // pred_check_branch
      %83 = sbr.rel (0) target = $region49
    $region48: #{tpu_custom_call.1} parent=1 // pred_region
      %84 = dma.done [#allocation8], 512
    $region49: #{tpu_custom_call.1} parent=1 // pred_fallthru
      _
    // Predicated region
    $region50: #{tpu_custom_call.1} parent=1 // pred_check
      _
    $region51: #{tpu_custom_call.1} parent=1 // pred_check_branch
      %86 = sbr.rel (0) target = $region53
    $region52: #{tpu_custom_call.1} parent=1 // pred_region
      %87 = dma.done [#allocation8], 1024
    $region53: #{tpu_custom_call.1} parent=1 // pred_fallthru
      _
    // Predicated region
    $region54: #{tpu_custom_call.1} parent=1 // pred_check
      _
    $region55: #{tpu_custom_call.1} parent=1 // pred_check_branch
      %89 = sbr.rel (0) target = $region57
    $region56: #{tpu_custom_call.1} parent=1 // pred_region
      %90 = dma.done [#allocation11], 256
    $region57: #{tpu_custom_call.1} parent=1 // pred_fallthru
      _
    %v92 = vld [vmem:[#allocation4] sm:$0xff]
    %v93 = vld [vmem:[#allocation4 + $0x8] sm:$0xff]
    %v94 = vld [vmem:[#allocation4 + $0x10] sm:$0xff]
    %v95 = vld [vmem:[#allocation4 + $0x18] sm:$0xff]
    %v96 = vld [vmem:[#allocation7] sm:$0xff]
    %v97 = vld [vmem:[#allocation7 + $0x8] sm:$0xff]
    %v98 = vld [vmem:[#allocation7 + $0x10] sm:$0xff]
    %v99 = vld [vmem:[#allocation7 + $0x18] sm:$0xff]
    %v100 = vld [vmem:[%s3] sm:$0x3]
    %v101 = vld [vmem:[#allocation9] sm:$0xff]
    %v102 = vld [vmem:[#allocation9 + $0x8] sm:$0xff]
    %v103 = vld [vmem:[#allocation9 + $0x10] sm:$0xff]
    %v104 = vld [vmem:[#allocation9 + $0x18] sm:$0xff]
    %v105 = vld [vmem:[#allocation9 + $0x20] sm:$0xff]
    %v106 = vld [vmem:[#allocation9 + $0x28] sm:$0xff]
    %v107 = vld [vmem:[#allocation9 + $0x30] sm:$0xff]
    %v108 = vld [vmem:[#allocation9 + $0x38] sm:$0xff]
    %v109 = vld [vmem:[%s0] sm:$0xf]
    %v110 = vld [vmem:[%s0 + $0x4] sm:$0xf]
    %v111 = vld [vmem:[%s0 + $0x8] sm:$0xf]
    %v112 = vld [vmem:[%s0 + $0xc] sm:$0xf]
    %v113 = vld [vmem:[%s0 + $0x10] sm:$0xf]
    %v114 = vld [vmem:[%s0 + $0x14] sm:$0xf]
    %v115 = vld [vmem:[%s0 + $0x18] sm:$0xf]
    %v116 = vld [vmem:[%s0 + $0x1c] sm:$0xf]
    %s117 = scalar_lea.vmem %s0, 28
    %v118 = vld [vmem:[%s117] sm:$0xf]
    %s119 = scalar_lea.vmem %s0, 24
    %v120 = vld [vmem:[%s119] sm:$0xf]
    %s121 = scalar_lea.vmem %s0, 20
    %v122 = vld [vmem:[%s121] sm:$0xf]
    %s123 = scalar_lea.vmem %s0, 16
    %v124 = vld [vmem:[%s123] sm:$0xf]
    %s125 = scalar_lea.vmem %s0, 12
    %v126 = vld [vmem:[%s125] sm:$0xf]
    %s127 = scalar_lea.vmem %s0, 8
    %v128 = vld [vmem:[%s127] sm:$0xf]
    %s129 = scalar_lea.vmem %s0, 4
    %v130 = vld [vmem:[%s129] sm:$0xf]
    %v132 = vunpack.c.l.b16 %v120
    %v133 = vpack.c.b16 %v132, %v132
    %v135 = vunpack.c.l.b16 %v124
    %v136 = vpack.c.b16 %v135, %v135
    %v138 = vunpack.c.l.b16 %v128
    %v139 = vpack.c.b16 %v138, %v138
    %v141 = vunpack.c.l.b16 %v109
    %v142 = vpack.c.b16 %v141, %v141
    %vm143 = vcmask 1043456
    %v146 = vsel %vm143, %v118, %v133
    %v149 = vsel %vm143, %v122, %v136
    %v152 = vsel %vm143, %v126, %v139
    %v155 = vsel %vm143, %v130, %v142
    %v160 = vunpack.c.l.b16 %v96
    %v161 = vunpack.c.h.b16 %v96
    %v162 = vunpack.c.l.b16 %v97
    %v163 = vunpack.c.h.b16 %v97
    %v164 = vunpack.c.l.b16 %v98
    %v165 = vunpack.c.h.b16 %v98
    %v166 = vunpack.c.l.b16 %v99
    %v167 = vunpack.c.h.b16 %v99
    %v168 = vpack.c.b16 %v162, %v160
    %v169 = vpack.c.b16 %v163, %v161
    %v170 = vpack.c.b16 %v166, %v164
    %v171 = vpack.c.b16 %v167, %v165
    %vm176 = vcmask 261120
    %v177 = vsel %vm176, %v146, 0
    %v179 = vsel %vm176, %v149, 0
    %v181 = vsel %vm176, %v152, 0
    %v183 = vsel %vm176, %v155, 0
    %185 = vmatprep.subr.bf16.mxu0 0
    %186 = vmatpush1.bf16.msra.mxu0 0
    %187 = vmatprep.subr.bf16.mxu0 0
    %188 = vmatpush1.bf16.msra.mxu0 0
    %189 = vmatprep.subr.bf16.mxu0 0
    %190 = vmatpush1.bf16.msra.mxu0 0
    %191 = vmatprep.subr.bf16.mxu0 0
    %192 = vmatpush1.bf16.msra.mxu0 0
    %193 = vmatprep.subr.bf16.mxu0 0
    %194 = vmatpush1.bf16.msra.mxu0 0
    %195 = vmatprep.subr.bf16.mxu0 0
    %196 = vmatpush1.bf16.msra.mxu0 0
    %197 = vmatprep.subr.bf16.mxu0 %v171
    %198 = vmatpush1.bf16.msra.mxu0 %v170
    %199 = vmatprep.subr.bf16.mxu0 %v169
    %200 = vmatpush1.bf16.msra.mxu0 %v168
    %201 = vmatprep.subr.bf16.mxu0 0
    %202 = vmatpush2.bf16.msra.mxu0 0
    %203 = vmatprep.subr.bf16.mxu0 0
    %204 = vmatpush2.bf16.msra.mxu0 0
    %205 = vmatprep.subr.bf16.mxu0 0
    %206 = vmatpush2.bf16.msra.mxu0 0
    %207 = vmatprep.subr.bf16.mxu0 0
    %208 = vmatpush2.bf16.msra.mxu0 0
    %209 = vmatprep.subr.bf16.mxu0 0
    %210 = vmatpush2.bf16.msra.mxu0 0
    %211 = vmatprep.subr.bf16.mxu0 0
    %212 = vmatpush2.bf16.msra.mxu0 0
    %213 = vmatprep.subr.bf16.mxu0 0
    %214 = vmatpush2.bf16.msra.mxu0 0
    %215 = vmatprep.subr.bf16.mxu0 0
    %216 = vmatpush2.bf16.msra.mxu0 0
    %217 = vmatprep.mubr.bf16.mxu0 0
    %218 = vmatmul.mubr.bf16.gmra.mxu0 %v177
    %v219 = vpop.f32.mrf.mxu0
    %v220 = vadd.f32 0.0, %v219
    %v221 = vpop.f32.mrf.mxu0
    %v222 = vadd.f32 0.0, %v221
    %v223 = vpop.f32.mrf.mxu0
    %v224 = vadd.f32 0.0, %v223
    %v225 = vpop.f32.mrf.mxu0
    %v226 = vadd.f32 0.0, %v225
    %227 = vmatprep.mubr.bf16.mxu0 0
    %228 = vmatmul.mubr.bf16.gmra.mxu0 %v179
    %v229 = vpop.f32.mrf.mxu0
    %v230 = vadd.f32 0.0, %v229
    %v231 = vpop.f32.mrf.mxu0
    %v232 = vadd.f32 0.0, %v231
    %v233 = vpop.f32.mrf.mxu0
    %v234 = vadd.f32 0.0, %v233
    %v235 = vpop.f32.mrf.mxu0
    %v236 = vadd.f32 0.0, %v235
    %237 = vmatprep.mubr.bf16.mxu0 0
    %238 = vmatmul.mubr.bf16.gmra.mxu0 %v181
    %v239 = vpop.f32.mrf.mxu0
    %v240 = vadd.f32 0.0, %v239
    %v241 = vpop.f32.mrf.mxu0
    %v242 = vadd.f32 0.0, %v241
    %v243 = vpop.f32.mrf.mxu0
    %v244 = vadd.f32 0.0, %v243
    %v245 = vpop.f32.mrf.mxu0
    %v246 = vadd.f32 0.0, %v245
    %247 = vmatprep.mubr.bf16.mxu0 0
    %248 = vmatmul.mubr.bf16.gmra.mxu0 %v183
    %v249 = vpop.f32.mrf.mxu0
    %v250 = vadd.f32 0.0, %v249
    %v251 = vpop.f32.mrf.mxu0
    %v252 = vadd.f32 0.0, %v251
    %v253 = vpop.f32.mrf.mxu0
    %v254 = vadd.f32 0.0, %v253
    %v255 = vpop.f32.mrf.mxu0
    %v256 = vadd.f32 0.0, %v255
    %257 = vdwg.mxu0
    %v265 = vunpack.c.l.b16 %v110
    %v266 = vunpack.c.l.b16 %v111
    %v267 = vunpack.c.l.b16 %v112
    %v268 = vunpack.c.l.b16 %v113
    %v269 = vunpack.c.l.b16 %v114
    %v270 = vunpack.c.l.b16 %v115
    %v271 = vunpack.c.l.b16 %v116
    %v272 = vpack.c.b16 %v265, %v141
    %v273 = vpack.c.b16 %v267, %v266
    %v274 = vpack.c.b16 %v269, %v268
    %v275 = vpack.c.b16 %v271, %v270
    %v280 = vunpack.c.l.b16 %v92
    %v281 = vunpack.c.h.b16 %v92
    %v282 = vunpack.c.l.b16 %v93
    %v283 = vunpack.c.h.b16 %v93
    %v284 = vunpack.c.l.b16 %v94
    %v285 = vunpack.c.h.b16 %v94
    %v286 = vunpack.c.l.b16 %v95
    %v287 = vunpack.c.h.b16 %v95
    %v288 = vpack.c.b16 %v282, %v280
    %v289 = vpack.c.b16 %v283, %v281
    %v290 = vpack.c.b16 %v286, %v284
    %v291 = vpack.c.b16 %v287, %v285
    %v297 = vsel %vm176, %v272, 0
    %v300 = vsel %vm176, %v273, 0
    %v303 = vsel %vm176, %v274, 0
    %v306 = vsel %vm176, %v275, 0
    %308 = vmatprep.subr.bf16.mxu0 0
    %309 = vmatpush1.bf16.msra.mxu0 0
    %310 = vmatprep.subr.bf16.mxu0 0
    %311 = vmatpush1.bf16.msra.mxu0 0
    %312 = vmatprep.subr.bf16.mxu0 0
    %313 = vmatpush1.bf16.msra.mxu0 0
    %314 = vmatprep.subr.bf16.mxu0 0
    %315 = vmatpush1.bf16.msra.mxu0 0
    %316 = vmatprep.subr.bf16.mxu0 0
    %317 = vmatpush1.bf16.msra.mxu0 0
    %318 = vmatprep.subr.bf16.mxu0 0
    %319 = vmatpush1.bf16.msra.mxu0 0
    %320 = vmatprep.subr.bf16.mxu0 %v291
    %321 = vmatpush1.bf16.msra.mxu0 %v290
    %322 = vmatprep.subr.bf16.mxu0 %v289
    %323 = vmatpush1.bf16.msra.mxu0 %v288
    %324 = vmatprep.subr.bf16.mxu0 0
    %325 = vmatpush2.bf16.msra.mxu0 0
    %326 = vmatprep.subr.bf16.mxu0 0
    %327 = vmatpush2.bf16.msra.mxu0 0
    %328 = vmatprep.subr.bf16.mxu0 0
    %329 = vmatpush2.bf16.msra.mxu0 0
    %330 = vmatprep.subr.bf16.mxu0 0
    %331 = vmatpush2.bf16.msra.mxu0 0
    %332 = vmatprep.subr.bf16.mxu0 0
    %333 = vmatpush2.bf16.msra.mxu0 0
    %334 = vmatprep.subr.bf16.mxu0 0
    %335 = vmatpush2.bf16.msra.mxu0 0
    %336 = vmatprep.subr.bf16.mxu0 0
    %337 = vmatpush2.bf16.msra.mxu0 0
    %338 = vmatprep.subr.bf16.mxu0 0
    %339 = vmatpush2.bf16.msra.mxu0 0
    %340 = vmatprep.mubr.bf16.mxu0 0
    %341 = vmatmul.mubr.bf16.gmra.mxu0 %v297
    %v342 = vpop.f32.mrf.mxu0
    %v343 = vadd.f32 %v220, %v342
    %v344 = vpop.f32.mrf.mxu0
    %v345 = vadd.f32 %v222, %v344
    %v346 = vpop.f32.mrf.mxu0
    %v347 = vadd.f32 %v224, %v346
    %v348 = vpop.f32.mrf.mxu0
    %v349 = vadd.f32 %v226, %v348
    %350 = vmatprep.mubr.bf16.mxu0 0
    %351 = vmatmul.mubr.bf16.gmra.mxu0 %v300
    %v352 = vpop.f32.mrf.mxu0
    %v353 = vadd.f32 %v230, %v352
    %v354 = vpop.f32.mrf.mxu0
    %v355 = vadd.f32 %v232, %v354
    %v356 = vpop.f32.mrf.mxu0
    %v357 = vadd.f32 %v234, %v356
    %v358 = vpop.f32.mrf.mxu0
    %v359 = vadd.f32 %v236, %v358
    %360 = vmatprep.mubr.bf16.mxu0 0
    %361 = vmatmul.mubr.bf16.gmra.mxu0 %v303
    %v362 = vpop.f32.mrf.mxu0
    %v363 = vadd.f32 %v240, %v362
    %v364 = vpop.f32.mrf.mxu0
    %v365 = vadd.f32 %v242, %v364
    %v366 = vpop.f32.mrf.mxu0
    %v367 = vadd.f32 %v244, %v366
    %v368 = vpop.f32.mrf.mxu0
    %v369 = vadd.f32 %v246, %v368
    %370 = vmatprep.mubr.bf16.mxu0 0
    %371 = vmatmul.mubr.bf16.gmra.mxu0 %v306
    %v372 = vpop.f32.mrf.mxu0
    %v373 = vadd.f32 %v250, %v372
    %v374 = vpop.f32.mrf.mxu0
    %v375 = vadd.f32 %v252, %v374
    %v376 = vpop.f32.mrf.mxu0
    %v377 = vadd.f32 %v254, %v376
    %v378 = vpop.f32.mrf.mxu0
    %v379 = vadd.f32 %v256, %v378
    %380 = vdwg.mxu0
    %v382 = vlaneseq
    %v383 = vshrl.u32 %v382, 7
    %v384 = vsub.s32 0, %v383
    %v385 = vrot.slane %v100, %v384
    %v386 = vlaneseq
    %v387 = vshrl.u32 %v386, 7
    %v388 = vsub.s32 1, %v387
    %v389 = vrot.slane %v100, %v388
    %v392 = vadd.f32 %v343, %v385
    %v393 = vadd.f32 %v345, %v389
    %v394 = vadd.f32 %v347, %v385
    %v395 = vadd.f32 %v349, %v389
    %v396 = vadd.f32 %v353, %v385
    %v397 = vadd.f32 %v355, %v389
    %v398 = vadd.f32 %v357, %v385
    %v399 = vadd.f32 %v359, %v389
    %v400 = vadd.f32 %v363, %v385
    %v401 = vadd.f32 %v365, %v389
    %v402 = vadd.f32 %v367, %v385
    %v403 = vadd.f32 %v369, %v389
    %v404 = vadd.f32 %v373, %v385
    %v405 = vadd.f32 %v375, %v389
    %v406 = vadd.f32 %v377, %v385
    %v407 = vadd.f32 %v379, %v389
    %408 = vst [vmem:[#allocation2] sm:$0xff] %v392
    %409 = vst [vmem:[#allocation2 + $0x8] sm:$0xff] %v393
    %410 = vst [vmem:[#allocation2 + $0x10] sm:$0xff] %v394
    %411 = vst [vmem:[#allocation2 + $0x18] sm:$0xff] %v395
    %412 = vst [vmem:[#allocation2 + $0x20] sm:$0xff] %v396
    %413 = vst [vmem:[#allocation2 + $0x28] sm:$0xff] %v397
    %414 = vst [vmem:[#allocation2 + $0x30] sm:$0xff] %v398
    %415 = vst [vmem:[#allocation2 + $0x38] sm:$0xff] %v399
    %416 = vst [vmem:[#allocation2 + $0x40] sm:$0xff] %v400
    %417 = vst [vmem:[#allocation2 + $0x48] sm:$0xff] %v401
    %418 = vst [vmem:[#allocation2 + $0x50] sm:$0xff] %v402
    %419 = vst [vmem:[#allocation2 + $0x58] sm:$0xff] %v403
    %420 = vst [vmem:[#allocation2 + $0x60] sm:$0xff] %v404
    %421 = vst [vmem:[#allocation2 + $0x68] sm:$0xff] %v405
    %422 = vst [vmem:[#allocation2 + $0x70] sm:$0xff] %v406
    %423 = vst [vmem:[#allocation2 + $0x78] sm:$0xff] %v407
    %v424 = vld [vmem:[#allocation2] sm:$0xff]
    %v425 = vld [vmem:[#allocation2 + $0x8] sm:$0xff]
    %v434 = vunpack.c.l.b16 %v101
    %v435 = vunpack.c.h.b16 %v101
    %v436 = vunpack.c.l.b16 %v102
    %v437 = vunpack.c.h.b16 %v102
    %v438 = vunpack.c.l.b16 %v103
    %v439 = vunpack.c.h.b16 %v103
    %v440 = vunpack.c.l.b16 %v104
    %v441 = vunpack.c.h.b16 %v104
    %v442 = vunpack.c.l.b16 %v105
    %v443 = vunpack.c.h.b16 %v105
    %v444 = vunpack.c.l.b16 %v106
    %v445 = vunpack.c.h.b16 %v106
    %v446 = vunpack.c.l.b16 %v107
    %v447 = vunpack.c.h.b16 %v107
    %v448 = vunpack.c.l.b16 %v108
    %v449 = vunpack.c.h.b16 %v108
    %v450 = vpack.c.b16 %v436, %v434
    %v451 = vpack.c.b16 %v437, %v435
    %v452 = vpack.c.b16 %v440, %v438
    %v453 = vpack.c.b16 %v441, %v439
    %v454 = vpack.c.b16 %v444, %v442
    %v455 = vpack.c.b16 %v445, %v443
    %v456 = vpack.c.b16 %v448, %v446
    %v457 = vpack.c.b16 %v449, %v447
    %vm466 = vcmask 523264
    %v468 = vsel %vm466, 0, 0
    %470 = vmatprep.subr.bf16.mxu0 0
    %471 = vmatpush1.bf16.msra.mxu0 0
    %472 = vmatprep.subr.bf16.mxu0 0
    %473 = vmatpush1.bf16.msra.mxu0 0
    %474 = vmatprep.subr.bf16.mxu0 0
    %475 = vmatpush1.bf16.msra.mxu0 0
    %476 = vmatprep.subr.bf16.mxu0 0
    %477 = vmatpush1.bf16.msra.mxu0 0
    %478 = vmatprep.subr.bf16.mxu0 %v457
    %479 = vmatpush1.bf16.msra.mxu0 %v456
    %480 = vmatprep.subr.bf16.mxu0 %v455
    %481 = vmatpush1.bf16.msra.mxu0 %v454
    %482 = vmatprep.subr.bf16.mxu0 %v453
    %483 = vmatpush1.bf16.msra.mxu0 %v452
    %484 = vmatprep.subr.bf16.mxu0 %v451
    %485 = vmatpush1.bf16.msra.mxu0 %v450
    %486 = vmatprep.subr.bf16.mxu0 0
    %487 = vmatpush2.bf16.msra.mxu0 0
    %488 = vmatprep.subr.bf16.mxu0 0
    %489 = vmatpush2.bf16.msra.mxu0 0
    %490 = vmatprep.subr.bf16.mxu0 0
    %491 = vmatpush2.bf16.msra.mxu0 0
    %492 = vmatprep.subr.bf16.mxu0 0
    %493 = vmatpush2.bf16.msra.mxu0 0
    %494 = vmatprep.subr.bf16.mxu0 0
    %495 = vmatpush2.bf16.msra.mxu0 0
    %496 = vmatprep.subr.bf16.mxu0 0
    %497 = vmatpush2.bf16.msra.mxu0 0
    %498 = vmatprep.subr.bf16.mxu0 0
    %499 = vmatpush2.bf16.msra.mxu0 0
    %500 = vmatprep.subr.bf16.mxu0 0
    %501 = vmatpush2.bf16.msra.mxu0 0
    %502 = vmatprep.mubr.bf16.mxu0 0
    %503 = vmatmul.mubr.bf16.gmra.mxu0 %v468
    %v504 = vpop.f32.mrf.mxu0
    %v505 = vadd.f32 0.0, %v504
    %v506 = vpop.f32.mrf.mxu0
    %v507 = vadd.f32 0.0, %v506
    %v508 = vpop.f32.mrf.mxu0
    %v509 = vpop.f32.mrf.mxu0
    %510 = vdwg.mxu0
    %v511 = vadd.f32 %v424, %v505
    %v512 = vadd.f32 %v425, %v507
    %v513 = vxor.u32 %v511, 2147483648
    %v514 = vxor.u32 %v512, 2147483648
    %v515 = vmul.f32 %v513, 1.442695
    %v516 = vpow.pop %v515
    %v517 = vmul.f32 %v514, 1.442695
    %v518 = vpow.pop %v517
    %v519 = vadd.f32 %v516, 1.0
    %v520 = vadd.f32 %v518, 1.0
    %v521 = vrcp.pop %v519
    %v522 = vmul.f32 1.0, %v521
    %v523 = vrcp.pop %v520
    %v524 = vmul.f32 1.0, %v523
    %v525 = vtanh.pop %v512
    %v526 = vmul.f32 %v522, 0.0
    %v527 = vmul.f32 %v522, %v525
    %529 = vrot.lane.b32.xlu0 %v527, 64
    %v530 = vpop.permute.xlu0 %529
    %v532 = vadd.f32 %v526, %v530
    %v533 = vtanh.pop %v532
    %v534 = vmul.f32 %v524, %v533
    %v535 = vpack.c.bf16 %v534, %v534
    %v537 = vunpack.c.l.b16 %v535
    %v538 = vpack.c.b16 %v537, %v537
    %539 = vrot.lane.b32.xlu0 %v538, 64
    %v540 = vpop.permute.xlu0 %539
    %vm542 = vcmask 257024
    %543 = vst.msk [vmem:[#allocation3] sm:$0xf] %vm542, %v540
    %s544 = scalar_lea.vmem [#allocation3], 28
    %vm545 = vcmask 519424
    %546 = vst.msk [vmem:[%s544] sm:$0xf] %vm545, %v540
    %s547 = scalar_lea.vmem [#allocation2], 16
    %v548 = vld [vmem:[%s547] sm:$0xff]
    %v549 = vld [vmem:[%s547 + $0x8] sm:$0xff]
    %550 = vrot.lane.b32.xlu0 %v535, 64
    %v551 = vpop.permute.xlu0 %550
    %v553 = vsel %vm466, %v551, 0
    %555 = vmatprep.subr.bf16.mxu0 0
    %556 = vmatpush1.bf16.msra.mxu0 0
    %557 = vmatprep.subr.bf16.mxu0 0
    %558 = vmatpush1.bf16.msra.mxu0 0
    %559 = vmatprep.subr.bf16.mxu0 0
    %560 = vmatpush1.bf16.msra.mxu0 0
    %561 = vmatprep.subr.bf16.mxu0 0
    %562 = vmatpush1.bf16.msra.mxu0 0
    %563 = vmatprep.subr.bf16.mxu0 %v457
    %564 = vmatpush1.bf16.msra.mxu0 %v456
    %565 = vmatprep.subr.bf16.mxu0 %v455
    %566 = vmatpush1.bf16.msra.mxu0 %v454
    %567 = vmatprep.subr.bf16.mxu0 %v453
    %568 = vmatpush1.bf16.msra.mxu0 %v452
    %569 = vmatprep.subr.bf16.mxu0 %v451
    %570 = vmatpush1.bf16.msra.mxu0 %v450
    %571 = vmatprep.subr.bf16.mxu0 0
    %572 = vmatpush2.bf16.msra.mxu0 0
    %573 = vmatprep.subr.bf16.mxu0 0
    %574 = vmatpush2.bf16.msra.mxu0 0
    %575 = vmatprep.subr.bf16.mxu0 0
    %576 = vmatpush2.bf16.msra.mxu0 0
    %577 = vmatprep.subr.bf16.mxu0 0
    %578 = vmatpush2.bf16.msra.mxu0 0
    %579 = vmatprep.subr.bf16.mxu0 0
    %580 = vmatpush2.bf16.msra.mxu0 0
    %581 = vmatprep.subr.bf16.mxu0 0
    %582 = vmatpush2.bf16.msra.mxu0 0
    %583 = vmatprep.subr.bf16.mxu0 0
    %584 = vmatpush2.bf16.msra.mxu0 0
    %585 = vmatprep.subr.bf16.mxu0 0
    %586 = vmatpush2.bf16.msra.mxu0 0
    %587 = vmatprep.mubr.bf16.mxu0 0
    %588 = vmatmul.mubr.bf16.gmra.mxu0 %v553
    %v589 = vpop.f32.mrf.mxu0
    %v590 = vadd.f32 0.0, %v589
    %v591 = vpop.f32.mrf.mxu0
    %v592 = vadd.f32 0.0, %v591
    %v593 = vpop.f32.mrf.mxu0
    %v594 = vpop.f32.mrf.mxu0
    %595 = vdwg.mxu0
    %v596 = vadd.f32 %v548, %v590
    %v597 = vadd.f32 %v549, %v592
    %v598 = vxor.u32 %v596, 2147483648
    %v599 = vxor.u32 %v597, 2147483648
    %v600 = vmul.f32 %v598, 1.442695
    %v601 = vpow.pop %v600
    %v602 = vmul.f32 %v599, 1.442695
    %v603 = vpow.pop %v602
    %v604 = vadd.f32 %v601, 1.0
    %v605 = vadd.f32 %v603, 1.0
    %v606 = vrcp.pop %v604
    %v607 = vmul.f32 1.0, %v606
    %v608 = vrcp.pop %v605
    %v609 = vmul.f32 1.0, %v608
    %v610 = vtanh.pop %v597
    %v611 = vmul.f32 %v607, %v532
    %v612 = vmul.f32 %v607, %v610
    %614 = vrot.lane.b32.xlu0 %v612, 64
    %v615 = vpop.permute.xlu0 %614
    %v617 = vadd.f32 %v611, %v615
    %v618 = vtanh.pop %v617
    %v619 = vmul.f32 %v609, %v618
    %v620 = vpack.c.bf16 %v619, %v619
    %v622 = vunpack.c.l.b16 %v620
    %v623 = vpack.c.b16 %v622, %v622
    %624 = vrot.lane.b32.xlu0 %v623, 64
    %v625 = vpop.permute.xlu0 %624
    %s627 = scalar_lea.vmem [#allocation3], 4
    %628 = vst.msk [vmem:[%s627] sm:$0xf] %vm542, %v625
    %s629 = scalar_lea.vmem [#allocation3], 24
    %630 = vst.msk [vmem:[%s629] sm:$0xf] %vm545, %v625
    %s631 = scalar_lea.vmem [#allocation2], 32
    %v632 = vld [vmem:[%s631] sm:$0xff]
    %v633 = vld [vmem:[%s631 + $0x8] sm:$0xff]
    %634 = vrot.lane.b32.xlu0 %v620, 64
    %v635 = vpop.permute.xlu0 %634
    %v637 = vsel %vm466, %v635, 0
    %639 = vmatprep.subr.bf16.mxu0 0
    %640 = vmatpush1.bf16.msra.mxu0 0
    %641 = vmatprep.subr.bf16.mxu0 0
    %642 = vmatpush1.bf16.msra.mxu0 0
    %643 = vmatprep.subr.bf16.mxu0 0
    %644 = vmatpush1.bf16.msra.mxu0 0
    %645 = vmatprep.subr.bf16.mxu0 0
    %646 = vmatpush1.bf16.msra.mxu0 0
    %647 = vmatprep.subr.bf16.mxu0 %v457
    %648 = vmatpush1.bf16.msra.mxu0 %v456
    %649 = vmatprep.subr.bf16.mxu0 %v455
    %650 = vmatpush1.bf16.msra.mxu0 %v454
    %651 = vmatprep.subr.bf16.mxu0 %v453
    %652 = vmatpush1.bf16.msra.mxu0 %v452
    %653 = vmatprep.subr.bf16.mxu0 %v451
    %654 = vmatpush1.bf16.msra.mxu0 %v450
    %655 = vmatprep.subr.bf16.mxu0 0
    %656 = vmatpush2.bf16.msra.mxu0 0
    %657 = vmatprep.subr.bf16.mxu0 0
    %658 = vmatpush2.bf16.msra.mxu0 0
    %659 = vmatprep.subr.bf16.mxu0 0
    %660 = vmatpush2.bf16.msra.mxu0 0
    %661 = vmatprep.subr.bf16.mxu0 0
    %662 = vmatpush2.bf16.msra.mxu0 0
    %663 = vmatprep.subr.bf16.mxu0 0
    %664 = vmatpush2.bf16.msra.mxu0 0
    %665 = vmatprep.subr.bf16.mxu0 0
    %666 = vmatpush2.bf16.msra.mxu0 0
    %667 = vmatprep.subr.bf16.mxu0 0
    %668 = vmatpush2.bf16.msra.mxu0 0
    %669 = vmatprep.subr.bf16.mxu0 0
    %670 = vmatpush2.bf16.msra.mxu0 0
    %671 = vmatprep.mubr.bf16.mxu0 0
    %672 = vmatmul.mubr.bf16.gmra.mxu0 %v637
    %v673 = vpop.f32.mrf.mxu0
    %v674 = vadd.f32 0.0, %v673
    %v675 = vpop.f32.mrf.mxu0
    %v676 = vadd.f32 0.0, %v675
    %v677 = vpop.f32.mrf.mxu0
    %v678 = vpop.f32.mrf.mxu0
    %679 = vdwg.mxu0
    %v680 = vadd.f32 %v632, %v674
    %v681 = vadd.f32 %v633, %v676
    %v682 = vxor.u32 %v680, 2147483648
    %v683 = vxor.u32 %v681, 2147483648
    %v684 = vmul.f32 %v682, 1.442695
    %v685 = vpow.pop %v684
    %v686 = vmul.f32 %v683, 1.442695
    %v687 = vpow.pop %v686
    %v688 = vadd.f32 %v685, 1.0
    %v689 = vadd.f32 %v687, 1.0
    %v690 = vrcp.pop %v688
    %v691 = vmul.f32 1.0, %v690
    %v692 = vrcp.pop %v689
    %v693 = vmul.f32 1.0, %v692
    %v694 = vtanh.pop %v681
    %v695 = vmul.f32 %v691, %v617
    %v696 = vmul.f32 %v691, %v694
    %698 = vrot.lane.b32.xlu0 %v696, 64
    %v699 = vpop.permute.xlu0 %698
    %v701 = vadd.f32 %v695, %v699
    %v702 = vtanh.pop %v701
    %v703 = vmul.f32 %v693, %v702
    %v704 = vpack.c.bf16 %v703, %v703
    %v706 = vunpack.c.l.b16 %v704
    %v707 = vpack.c.b16 %v706, %v706
    %708 = vrot.lane.b32.xlu0 %v707, 64
    %v709 = vpop.permute.xlu0 %708
    %s711 = scalar_lea.vmem [#allocation3], 8
    %712 = vst.msk [vmem:[%s711] sm:$0xf] %vm542, %v709
    %s713 = scalar_lea.vmem [#allocation3], 20
    %714 = vst.msk [vmem:[%s713] sm:$0xf] %vm545, %v709
    %s715 = scalar_lea.vmem [#allocation2], 48
    %v716 = vld [vmem:[%s715] sm:$0xff]
    %v717 = vld [vmem:[%s715 + $0x8] sm:$0xff]
    %718 = vrot.lane.b32.xlu0 %v704, 64
    %v719 = vpop.permute.xlu0 %718
    %v721 = vsel %vm466, %v719, 0
    %723 = vmatprep.subr.bf16.mxu0 0
    %724 = vmatpush1.bf16.msra.mxu0 0
    %725 = vmatprep.subr.bf16.mxu0 0
    %726 = vmatpush1.bf16.msra.mxu0 0
    %727 = vmatprep.subr.bf16.mxu0 0
    %728 = vmatpush1.bf16.msra.mxu0 0
    %729 = vmatprep.subr.bf16.mxu0 0
    %730 = vmatpush1.bf16.msra.mxu0 0
    %731 = vmatprep.subr.bf16.mxu0 %v457
    %732 = vmatpush1.bf16.msra.mxu0 %v456
    %733 = vmatprep.subr.bf16.mxu0 %v455
    %734 = vmatpush1.bf16.msra.mxu0 %v454
    %735 = vmatprep.subr.bf16.mxu0 %v453
    %736 = vmatpush1.bf16.msra.mxu0 %v452
    %737 = vmatprep.subr.bf16.mxu0 %v451
    %738 = vmatpush1.bf16.msra.mxu0 %v450
    %739 = vmatprep.subr.bf16.mxu0 0
    %740 = vmatpush2.bf16.msra.mxu0 0
    %741 = vmatprep.subr.bf16.mxu0 0
    %742 = vmatpush2.bf16.msra.mxu0 0
    %743 = vmatprep.subr.bf16.mxu0 0
    %744 = vmatpush2.bf16.msra.mxu0 0
    %745 = vmatprep.subr.bf16.mxu0 0
    %746 = vmatpush2.bf16.msra.mxu0 0
    %747 = vmatprep.subr.bf16.mxu0 0
    %748 = vmatpush2.bf16.msra.mxu0 0
    %749 = vmatprep.subr.bf16.mxu0 0
    %750 = vmatpush2.bf16.msra.mxu0 0
    %751 = vmatprep.subr.bf16.mxu0 0
    %752 = vmatpush2.bf16.msra.mxu0 0
    %753 = vmatprep.subr.bf16.mxu0 0
    %754 = vmatpush2.bf16.msra.mxu0 0
    %755 = vmatprep.mubr.bf16.mxu0 0
    %756 = vmatmul.mubr.bf16.gmra.mxu0 %v721
    %v757 = vpop.f32.mrf.mxu0
    %v758 = vadd.f32 0.0, %v757
    %v759 = vpop.f32.mrf.mxu0
    %v760 = vadd.f32 0.0, %v759
    %v761 = vpop.f32.mrf.mxu0
    %v762 = vpop.f32.mrf.mxu0
    %763 = vdwg.mxu0
    %v764 = vadd.f32 %v716, %v758
    %v765 = vadd.f32 %v717, %v760
    %v766 = vxor.u32 %v764, 2147483648
    %v767 = vxor.u32 %v765, 2147483648
    %v768 = vmul.f32 %v766, 1.442695
    %v769 = vpow.pop %v768
    %v770 = vmul.f32 %v767, 1.442695
    %v771 = vpow.pop %v770
    %v772 = vadd.f32 %v769, 1.0
    %v773 = vadd.f32 %v771, 1.0
    %v774 = vrcp.pop %v772
    %v775 = vmul.f32 1.0, %v774
    %v776 = vrcp.pop %v773
    %v777 = vmul.f32 1.0, %v776
    %v778 = vtanh.pop %v765
    %v779 = vmul.f32 %v775, %v701
    %v780 = vmul.f32 %v775, %v778
    %782 = vrot.lane.b32.xlu0 %v780, 64
    %v783 = vpop.permute.xlu0 %782
    %v785 = vadd.f32 %v779, %v783
    %v786 = vtanh.pop %v785
    %v787 = vmul.f32 %v777, %v786
    %v788 = vpack.c.bf16 %v787, %v787
    %v790 = vunpack.c.l.b16 %v788
    %v791 = vpack.c.b16 %v790, %v790
    %792 = vrot.lane.b32.xlu0 %v791, 64
    %v793 = vpop.permute.xlu0 %792
    %s795 = scalar_lea.vmem [#allocation3], 12
    %796 = vst.msk [vmem:[%s795] sm:$0xf] %vm542, %v793
    %s797 = scalar_lea.vmem [#allocation3], 16
    %798 = vst.msk [vmem:[%s797] sm:$0xf] %vm545, %v793
    %s799 = scalar_lea.vmem [#allocation2], 64
    %v800 = vld [vmem:[%s799] sm:$0xff]
    %v801 = vld [vmem:[%s799 + $0x8] sm:$0xff]
    %802 = vrot.lane.b32.xlu0 %v788, 64
    %v803 = vpop.permute.xlu0 %802
    %v805 = vsel %vm466, %v803, 0
    %807 = vmatprep.subr.bf16.mxu0 0
    %808 = vmatpush1.bf16.msra.mxu0 0
    %809 = vmatprep.subr.bf16.mxu0 0
    %810 = vmatpush1.bf16.msra.mxu0 0
    %811 = vmatprep.subr.bf16.mxu0 0
    %812 = vmatpush1.bf16.msra.mxu0 0
    %813 = vmatprep.subr.bf16.mxu0 0
    %814 = vmatpush1.bf16.msra.mxu0 0
    %815 = vmatprep.subr.bf16.mxu0 %v457
    %816 = vmatpush1.bf16.msra.mxu0 %v456
    %817 = vmatprep.subr.bf16.mxu0 %v455
    %818 = vmatpush1.bf16.msra.mxu0 %v454
    %819 = vmatprep.subr.bf16.mxu0 %v453
    %820 = vmatpush1.bf16.msra.mxu0 %v452
    %821 = vmatprep.subr.bf16.mxu0 %v451
    %822 = vmatpush1.bf16.msra.mxu0 %v450
    %823 = vmatprep.subr.bf16.mxu0 0
    %824 = vmatpush2.bf16.msra.mxu0 0
    %825 = vmatprep.subr.bf16.mxu0 0
    %826 = vmatpush2.bf16.msra.mxu0 0
    %827 = vmatprep.subr.bf16.mxu0 0
    %828 = vmatpush2.bf16.msra.mxu0 0
    %829 = vmatprep.subr.bf16.mxu0 0
    %830 = vmatpush2.bf16.msra.mxu0 0
    %831 = vmatprep.subr.bf16.mxu0 0
    %832 = vmatpush2.bf16.msra.mxu0 0
    %833 = vmatprep.subr.bf16.mxu0 0
    %834 = vmatpush2.bf16.msra.mxu0 0
    %835 = vmatprep.subr.bf16.mxu0 0
    %836 = vmatpush2.bf16.msra.mxu0 0
    %837 = vmatprep.subr.bf16.mxu0 0
    %838 = vmatpush2.bf16.msra.mxu0 0
    %839 = vmatprep.mubr.bf16.mxu0 0
    %840 = vmatmul.mubr.bf16.gmra.mxu0 %v805
    %v841 = vpop.f32.mrf.mxu0
    %v842 = vadd.f32 0.0, %v841
    %v843 = vpop.f32.mrf.mxu0
    %v844 = vadd.f32 0.0, %v843
    %v845 = vpop.f32.mrf.mxu0
    %v846 = vpop.f32.mrf.mxu0
    %847 = vdwg.mxu0
    %v848 = vadd.f32 %v800, %v842
    %v849 = vadd.f32 %v801, %v844
    %v850 = vxor.u32 %v848, 2147483648
    %v851 = vxor.u32 %v849, 2147483648
    %v852 = vmul.f32 %v850, 1.442695
    %v853 = vpow.pop %v852
    %v854 = vmul.f32 %v851, 1.442695
    %v855 = vpow.pop %v854
    %v856 = vadd.f32 %v853, 1.0
    %v857 = vadd.f32 %v855, 1.0
    %v858 = vrcp.pop %v856
    %v859 = vmul.f32 1.0, %v858
    %v860 = vrcp.pop %v857
    %v861 = vmul.f32 1.0, %v860
    %v862 = vtanh.pop %v849
    %v863 = vmul.f32 %v859, %v785
    %v864 = vmul.f32 %v859, %v862
    %866 = vrot.lane.b32.xlu0 %v864, 64
    %v867 = vpop.permute.xlu0 %866
    %v869 = vadd.f32 %v863, %v867
    %v870 = vtanh.pop %v869
    %v871 = vmul.f32 %v861, %v870
    %v872 = vpack.c.bf16 %v871, %v871
    %v874 = vunpack.c.l.b16 %v872
    %v875 = vpack.c.b16 %v874, %v874
    %876 = vrot.lane.b32.xlu0 %v875, 64
    %v877 = vpop.permute.xlu0 %876
    %879 = vst.msk [vmem:[%s797] sm:$0xf] %vm542, %v877
    %880 = vst.msk [vmem:[%s795] sm:$0xf] %vm545, %v877
    %s881 = scalar_lea.vmem [#allocation2], 80
    %v882 = vld [vmem:[%s881] sm:$0xff]
    %v883 = vld [vmem:[%s881 + $0x8] sm:$0xff]
    %884 = vrot.lane.b32.xlu0 %v872, 64
    %v885 = vpop.permute.xlu0 %884
    %v887 = vsel %vm466, %v885, 0
    %889 = vmatprep.subr.bf16.mxu0 0
    %890 = vmatpush1.bf16.msra.mxu0 0
    %891 = vmatprep.subr.bf16.mxu0 0
    %892 = vmatpush1.bf16.msra.mxu0 0
    %893 = vmatprep.subr.bf16.mxu0 0
    %894 = vmatpush1.bf16.msra.mxu0 0
    %895 = vmatprep.subr.bf16.mxu0 0
    %896 = vmatpush1.bf16.msra.mxu0 0
    %897 = vmatprep.subr.bf16.mxu0 %v457
    %898 = vmatpush1.bf16.msra.mxu0 %v456
    %899 = vmatprep.subr.bf16.mxu0 %v455
    %900 = vmatpush1.bf16.msra.mxu0 %v454
    %901 = vmatprep.subr.bf16.mxu0 %v453
    %902 = vmatpush1.bf16.msra.mxu0 %v452
    %903 = vmatprep.subr.bf16.mxu0 %v451
    %904 = vmatpush1.bf16.msra.mxu0 %v450
    %905 = vmatprep.subr.bf16.mxu0 0
    %906 = vmatpush2.bf16.msra.mxu0 0
    %907 = vmatprep.subr.bf16.mxu0 0
    %908 = vmatpush2.bf16.msra.mxu0 0
    %909 = vmatprep.subr.bf16.mxu0 0
    %910 = vmatpush2.bf16.msra.mxu0 0
    %911 = vmatprep.subr.bf16.mxu0 0
    %912 = vmatpush2.bf16.msra.mxu0 0
    %913 = vmatprep.subr.bf16.mxu0 0
    %914 = vmatpush2.bf16.msra.mxu0 0
    %915 = vmatprep.subr.bf16.mxu0 0
    %916 = vmatpush2.bf16.msra.mxu0 0
    %917 = vmatprep.subr.bf16.mxu0 0
    %918 = vmatpush2.bf16.msra.mxu0 0
    %919 = vmatprep.subr.bf16.mxu0 0
    %920 = vmatpush2.bf16.msra.mxu0 0
    %921 = vmatprep.mubr.bf16.mxu0 0
    %922 = vmatmul.mubr.bf16.gmra.mxu0 %v887
    %v923 = vpop.f32.mrf.mxu0
    %v924 = vadd.f32 0.0, %v923
    %v925 = vpop.f32.mrf.mxu0
    %v926 = vadd.f32 0.0, %v925
    %v927 = vpop.f32.mrf.mxu0
    %v928 = vpop.f32.mrf.mxu0
    %929 = vdwg.mxu0
    %v930 = vadd.f32 %v882, %v924
    %v931 = vadd.f32 %v883, %v926
    %v932 = vxor.u32 %v930, 2147483648
    %v933 = vxor.u32 %v931, 2147483648
    %v934 = vmul.f32 %v932, 1.442695
    %v935 = vpow.pop %v934
    %v936 = vmul.f32 %v933, 1.442695
    %v937 = vpow.pop %v936
    %v938 = vadd.f32 %v935, 1.0
    %v939 = vadd.f32 %v937, 1.0
    %v940 = vrcp.pop %v938
    %v941 = vmul.f32 1.0, %v940
    %v942 = vrcp.pop %v939
    %v943 = vmul.f32 1.0, %v942
    %v944 = vtanh.pop %v931
    %v945 = vmul.f32 %v941, %v869
    %v946 = vmul.f32 %v941, %v944
    %948 = vrot.lane.b32.xlu0 %v946, 64
    %v949 = vpop.permute.xlu0 %948
    %v951 = vadd.f32 %v945, %v949
    %v952 = vtanh.pop %v951
    %v953 = vmul.f32 %v943, %v952
    %v954 = vpack.c.bf16 %v953, %v953
    %v956 = vunpack.c.l.b16 %v954
    %v957 = vpack.c.b16 %v956, %v956
    %958 = vrot.lane.b32.xlu0 %v957, 64
    %v959 = vpop.permute.xlu0 %958
    %961 = vst.msk [vmem:[%s713] sm:$0xf] %vm542, %v959
    %962 = vst.msk [vmem:[%s711] sm:$0xf] %vm545, %v959
    %s963 = scalar_lea.vmem [#allocation2], 96
    %v964 = vld [vmem:[%s963] sm:$0xff]
    %v965 = vld [vmem:[%s963 + $0x8] sm:$0xff]
    %966 = vrot.lane.b32.xlu0 %v954, 64
    %v967 = vpop.permute.xlu0 %966
    %v969 = vsel %vm466, %v967, 0
    %971 = vmatprep.subr.bf16.mxu0 0
    %972 = vmatpush1.bf16.msra.mxu0 0
    %973 = vmatprep.subr.bf16.mxu0 0
    %974 = vmatpush1.bf16.msra.mxu0 0
    %975 = vmatprep.subr.bf16.mxu0 0
    %976 = vmatpush1.bf16.msra.mxu0 0
    %977 = vmatprep.subr.bf16.mxu0 0
    %978 = vmatpush1.bf16.msra.mxu0 0
    %979 = vmatprep.subr.bf16.mxu0 %v457
    %980 = vmatpush1.bf16.msra.mxu0 %v456
    %981 = vmatprep.subr.bf16.mxu0 %v455
    %982 = vmatpush1.bf16.msra.mxu0 %v454
    %983 = vmatprep.subr.bf16.mxu0 %v453
    %984 = vmatpush1.bf16.msra.mxu0 %v452
    %985 = vmatprep.subr.bf16.mxu0 %v451
    %986 = vmatpush1.bf16.msra.mxu0 %v450
    %987 = vmatprep.subr.bf16.mxu0 0
    %988 = vmatpush2.bf16.msra.mxu0 0
    %989 = vmatprep.subr.bf16.mxu0 0
    %990 = vmatpush2.bf16.msra.mxu0 0
    %991 = vmatprep.subr.bf16.mxu0 0
    %992 = vmatpush2.bf16.msra.mxu0 0
    %993 = vmatprep.subr.bf16.mxu0 0
    %994 = vmatpush2.bf16.msra.mxu0 0
    %995 = vmatprep.subr.bf16.mxu0 0
    %996 = vmatpush2.bf16.msra.mxu0 0
    %997 = vmatprep.subr.bf16.mxu0 0
    %998 = vmatpush2.bf16.msra.mxu0 0
    %999 = vmatprep.subr.bf16.mxu0 0
    %1000 = vmatpush2.bf16.msra.mxu0 0
    %1001 = vmatprep.subr.bf16.mxu0 0
    %1002 = vmatpush2.bf16.msra.mxu0 0
    %1003 = vmatprep.mubr.bf16.mxu0 0
    %1004 = vmatmul.mubr.bf16.gmra.mxu0 %v969
    %v1005 = vpop.f32.mrf.mxu0
    %v1006 = vadd.f32 0.0, %v1005
    %v1007 = vpop.f32.mrf.mxu0
    %v1008 = vadd.f32 0.0, %v1007
    %v1009 = vpop.f32.mrf.mxu0
    %v1010 = vpop.f32.mrf.mxu0
    %1011 = vdwg.mxu0
    %v1012 = vadd.f32 %v964, %v1006
    %v1013 = vadd.f32 %v965, %v1008
    %v1014 = vxor.u32 %v1012, 2147483648
    %v1015 = vxor.u32 %v1013, 2147483648
    %v1016 = vmul.f32 %v1014, 1.442695
    %v1017 = vpow.pop %v1016
    %v1018 = vmul.f32 %v1015, 1.442695
    %v1019 = vpow.pop %v1018
    %v1020 = vadd.f32 %v1017, 1.0
    %v1021 = vadd.f32 %v1019, 1.0
    %v1022 = vrcp.pop %v1020
    %v1023 = vmul.f32 1.0, %v1022
    %v1024 = vrcp.pop %v1021
    %v1025 = vmul.f32 1.0, %v1024
    %v1026 = vtanh.pop %v1013
    %v1027 = vmul.f32 %v1023, %v951
    %v1028 = vmul.f32 %v1023, %v1026
    %1030 = vrot.lane.b32.xlu0 %v1028, 64
    %v1031 = vpop.permute.xlu0 %1030
    %v1033 = vadd.f32 %v1027, %v1031
    %v1034 = vtanh.pop %v1033
    %v1035 = vmul.f32 %v1025, %v1034
    %v1036 = vpack.c.bf16 %v1035, %v1035
    %v1038 = vunpack.c.l.b16 %v1036
    %v1039 = vpack.c.b16 %v1038, %v1038
    %1040 = vrot.lane.b32.xlu0 %v1039, 64
    %v1041 = vpop.permute.xlu0 %1040
    %1043 = vst.msk [vmem:[%s629] sm:$0xf] %vm542, %v1041
    %1044 = vst.msk [vmem:[%s627] sm:$0xf] %vm545, %v1041
    %s1045 = scalar_lea.vmem [#allocation2], 112
    %v1046 = vld [vmem:[%s1045] sm:$0xff]
    %v1047 = vld [vmem:[%s1045 + $0x8] sm:$0xff]
    %1048 = vrot.lane.b32.xlu0 %v1036, 64
    %v1049 = vpop.permute.xlu0 %1048
    %v1051 = vsel %vm466, %v1049, 0
    %1053 = vmatprep.subr.bf16.mxu0 0
    %1054 = vmatpush1.bf16.msra.mxu0 0
    %1055 = vmatprep.subr.bf16.mxu0 0
    %1056 = vmatpush1.bf16.msra.mxu0 0
    %1057 = vmatprep.subr.bf16.mxu0 0
    %1058 = vmatpush1.bf16.msra.mxu0 0
    %1059 = vmatprep.subr.bf16.mxu0 0
    %1060 = vmatpush1.bf16.msra.mxu0 0
    %1061 = vmatprep.subr.bf16.mxu0 %v457
    %1062 = vmatpush1.bf16.msra.mxu0 %v456
    %1063 = vmatprep.subr.bf16.mxu0 %v455
    %1064 = vmatpush1.bf16.msra.mxu0 %v454
    %1065 = vmatprep.subr.bf16.mxu0 %v453
    %1066 = vmatpush1.bf16.msra.mxu0 %v452
    %1067 = vmatprep.subr.bf16.mxu0 %v451
    %1068 = vmatpush1.bf16.msra.mxu0 %v450
    %1069 = vmatprep.subr.bf16.mxu0 0
    %1070 = vmatpush2.bf16.msra.mxu0 0
    %1071 = vmatprep.subr.bf16.mxu0 0
    %1072 = vmatpush2.bf16.msra.mxu0 0
    %1073 = vmatprep.subr.bf16.mxu0 0
    %1074 = vmatpush2.bf16.msra.mxu0 0
    %1075 = vmatprep.subr.bf16.mxu0 0
    %1076 = vmatpush2.bf16.msra.mxu0 0
    %1077 = vmatprep.subr.bf16.mxu0 0
    %1078 = vmatpush2.bf16.msra.mxu0 0
    %1079 = vmatprep.subr.bf16.mxu0 0
    %1080 = vmatpush2.bf16.msra.mxu0 0
    %1081 = vmatprep.subr.bf16.mxu0 0
    %1082 = vmatpush2.bf16.msra.mxu0 0
    %1083 = vmatprep.subr.bf16.mxu0 0
    %1084 = vmatpush2.bf16.msra.mxu0 0
    %1085 = vmatprep.mubr.bf16.mxu0 0
    %1086 = vmatmul.mubr.bf16.gmra.mxu0 %v1051
    %v1087 = vpop.f32.mrf.mxu0
    %v1088 = vadd.f32 0.0, %v1087
    %v1089 = vpop.f32.mrf.mxu0
    %v1090 = vadd.f32 0.0, %v1089
    %v1091 = vpop.f32.mrf.mxu0
    %v1092 = vpop.f32.mrf.mxu0
    %1093 = vdwg.mxu0
    %v1094 = vadd.f32 %v1046, %v1088
    %v1095 = vadd.f32 %v1047, %v1090
    %v1096 = vxor.u32 %v1094, 2147483648
    %v1097 = vxor.u32 %v1095, 2147483648
    %v1098 = vmul.f32 %v1096, 1.442695
    %v1099 = vpow.pop %v1098
    %v1100 = vmul.f32 %v1097, 1.442695
    %v1101 = vpow.pop %v1100
    %v1102 = vadd.f32 %v1099, 1.0
    %v1103 = vadd.f32 %v1101, 1.0
    %v1104 = vrcp.pop %v1102
    %v1105 = vmul.f32 1.0, %v1104
    %v1106 = vrcp.pop %v1103
    %v1107 = vmul.f32 1.0, %v1106
    %v1108 = vtanh.pop %v1095
    %v1109 = vmul.f32 %v1105, %v1033
    %v1110 = vmul.f32 %v1105, %v1108
    %1112 = vrot.lane.b32.xlu0 %v1110, 64
    %v1113 = vpop.permute.xlu0 %1112
    %v1115 = vadd.f32 %v1109, %v1113
    %v1116 = vtanh.pop %v1115
    %v1117 = vmul.f32 %v1107, %v1116
    %v1118 = vpack.c.bf16 %v1117, %v1117
    %v1120 = vunpack.c.l.b16 %v1118
    %v1121 = vpack.c.b16 %v1120, %v1120
    %1122 = vrot.lane.b32.xlu0 %v1121, 64
    %v1123 = vpop.permute.xlu0 %1122
    %1125 = vst.msk [vmem:[%s544] sm:$0xf] %vm542, %v1123
    %1126 = vst.msk [vmem:[#allocation3] sm:$0xf] %vm545, %v1123
    %v1127 = vld [vmem:[%s5] sm:$0xf]
    %v1128 = vld [vmem:[%s5 + $0x4] sm:$0xf]
    %v1129 = vld [vmem:[%s5 + $0x8] sm:$0xf]
    %v1130 = vld [vmem:[%s5 + $0xc] sm:$0xf]
    %v1131 = vld [vmem:[%s6] sm:$0xf]
    %v1132 = vld [vmem:[%s6 + $0x4] sm:$0xf]
    %v1133 = vld [vmem:[%s6 + $0x8] sm:$0xf]
    %v1134 = vld [vmem:[%s6 + $0xc] sm:$0xf]
    %v1135 = vld [vmem:[%s6 + $0x10] sm:$0xf]
    %v1136 = vld [vmem:[%s6 + $0x14] sm:$0xf]
    %v1137 = vld [vmem:[%s6 + $0x18] sm:$0xf]
    %v1138 = vld [vmem:[%s6 + $0x1c] sm:$0xf]
    %v1139 = vld [vmem:[%s7] sm:$0x1]
    %v1140 = vld [vmem:[%s0] sm:$0xf]
    %v1141 = vld [vmem:[%s0 + $0x4] sm:$0xf]
    %v1142 = vld [vmem:[%s0 + $0x8] sm:$0xf]
    %v1143 = vld [vmem:[%s0 + $0xc] sm:$0xf]
    %v1144 = vld [vmem:[%s0 + $0x10] sm:$0xf]
    %v1145 = vld [vmem:[%s0 + $0x14] sm:$0xf]
    %v1146 = vld [vmem:[%s0 + $0x18] sm:$0xf]
    %v1147 = vld [vmem:[%s0 + $0x1c] sm:$0xf]
    %v1148 = vld [vmem:[#allocation3] sm:$0xf]
    %v1149 = vld [vmem:[#allocation3 + $0x4] sm:$0xf]
    %v1150 = vld [vmem:[#allocation3 + $0x8] sm:$0xf]
    %v1151 = vld [vmem:[#allocation3 + $0xc] sm:$0xf]
    %v1152 = vld [vmem:[#allocation3 + $0x10] sm:$0xf]
    %v1153 = vld [vmem:[#allocation3 + $0x14] sm:$0xf]
    %v1154 = vld [vmem:[#allocation3 + $0x18] sm:$0xf]
    %v1155 = vld [vmem:[#allocation3 + $0x1c] sm:$0xf]
    %v1164 = vunpack.c.l.b16 %v1148
    %v1165 = vunpack.c.l.b16 %v1149
    %v1166 = vunpack.c.l.b16 %v1150
    %v1167 = vunpack.c.l.b16 %v1151
    %v1168 = vunpack.c.l.b16 %v1152
    %v1169 = vunpack.c.l.b16 %v1153
    %v1170 = vunpack.c.l.b16 %v1154
    %v1171 = vunpack.c.l.b16 %v1155
    %v1172 = vpack.c.b16 %v1165, %v1164
    %v1173 = vpack.c.b16 %v1167, %v1166
    %v1174 = vpack.c.b16 %v1169, %v1168
    %v1175 = vpack.c.b16 %v1171, %v1170
    %v1184 = vunpack.c.l.b16 %v1131
    %v1185 = vunpack.c.l.b16 %v1132
    %v1186 = vunpack.c.l.b16 %v1133
    %v1187 = vunpack.c.l.b16 %v1134
    %v1188 = vunpack.c.l.b16 %v1135
    %v1189 = vunpack.c.l.b16 %v1136
    %v1190 = vunpack.c.l.b16 %v1137
    %v1191 = vunpack.c.l.b16 %v1138
    %v1192 = vpack.c.b16 %v1185, %v1184
    %v1193 = vpack.c.b16 %v1187, %v1186
    %v1194 = vpack.c.b16 %v1189, %v1188
    %v1195 = vpack.c.b16 %v1191, %v1190
    %v1201 = vsel %vm466, %v1172, 0
    %v1204 = vsel %vm466, %v1173, 0
    %v1207 = vsel %vm466, %v1174, 0
    %v1210 = vsel %vm466, %v1175, 0
    %1212 = vmatprep.subr.bf16.mxu0 0
    %1213 = vmatpush1.bf16.msra.mxu0 0
    %1214 = vmatprep.subr.bf16.mxu0 0
    %1215 = vmatpush1.bf16.msra.mxu0 0
    %1216 = vmatprep.subr.bf16.mxu0 0
    %1217 = vmatpush1.bf16.msra.mxu0 0
    %1218 = vmatprep.subr.bf16.mxu0 0
    %1219 = vmatpush1.bf16.msra.mxu0 0
    %1220 = vmatprep.subr.bf16.mxu0 0
    %1221 = vmatpush1.bf16.msra.mxu0 %v1195
    %1222 = vmatprep.subr.bf16.mxu0 0
    %1223 = vmatpush1.bf16.msra.mxu0 %v1194
    %1224 = vmatprep.subr.bf16.mxu0 0
    %1225 = vmatpush1.bf16.msra.mxu0 %v1193
    %1226 = vmatprep.subr.bf16.mxu0 0
    %1227 = vmatpush1.bf16.msra.mxu0 %v1192
    %1228 = vmatprep.subr.bf16.mxu0 0
    %1229 = vmatpush2.bf16.msra.mxu0 0
    %1230 = vmatprep.subr.bf16.mxu0 0
    %1231 = vmatpush2.bf16.msra.mxu0 0
    %1232 = vmatprep.subr.bf16.mxu0 0
    %1233 = vmatpush2.bf16.msra.mxu0 0
    %1234 = vmatprep.subr.bf16.mxu0 0
    %1235 = vmatpush2.bf16.msra.mxu0 0
    %1236 = vmatprep.subr.bf16.mxu0 0
    %1237 = vmatpush2.bf16.msra.mxu0 0
    %1238 = vmatprep.subr.bf16.mxu0 0
    %1239 = vmatpush2.bf16.msra.mxu0 0
    %1240 = vmatprep.subr.bf16.mxu0 0
    %1241 = vmatpush2.bf16.msra.mxu0 0
    %1242 = vmatprep.subr.bf16.mxu0 0
    %1243 = vmatpush2.bf16.msra.mxu0 0
    %1244 = vmatprep.mubr.bf16.mxu0 0
    %1245 = vmatmul.mubr.bf16.gmra.mxu0 %v1201
    %v1246 = vpop.f32.mrf.mxu0
    %v1247 = vadd.f32 0.0, %v1246
    %v1248 = vpop.f32.mrf.mxu0
    %v1249 = vpop.f32.mrf.mxu0
    %v1250 = vadd.f32 0.0, %v1249
    %v1251 = vpop.f32.mrf.mxu0
    %1252 = vmatprep.mubr.bf16.mxu0 0
    %1253 = vmatmul.mubr.bf16.gmra.mxu0 %v1204
    %v1254 = vpop.f32.mrf.mxu0
    %v1255 = vadd.f32 0.0, %v1254
    %v1256 = vpop.f32.mrf.mxu0
    %v1257 = vpop.f32.mrf.mxu0
    %v1258 = vadd.f32 0.0, %v1257
    %v1259 = vpop.f32.mrf.mxu0
    %1260 = vmatprep.mubr.bf16.mxu0 0
    %1261 = vmatmul.mubr.bf16.gmra.mxu0 %v1207
    %v1262 = vpop.f32.mrf.mxu0
    %v1263 = vadd.f32 0.0, %v1262
    %v1264 = vpop.f32.mrf.mxu0
    %v1265 = vpop.f32.mrf.mxu0
    %v1266 = vadd.f32 0.0, %v1265
    %v1267 = vpop.f32.mrf.mxu0
    %1268 = vmatprep.mubr.bf16.mxu0 0
    %1269 = vmatmul.mubr.bf16.gmra.mxu0 %v1210
    %v1270 = vpop.f32.mrf.mxu0
    %v1271 = vadd.f32 0.0, %v1270
    %v1272 = vpop.f32.mrf.mxu0
    %v1273 = vpop.f32.mrf.mxu0
    %v1274 = vadd.f32 0.0, %v1273
    %v1275 = vpop.f32.mrf.mxu0
    %1276 = vdwg.mxu0
    %v1285 = vunpack.c.l.b16 %v1140
    %v1286 = vunpack.c.l.b16 %v1141
    %v1287 = vunpack.c.l.b16 %v1142
    %v1288 = vunpack.c.l.b16 %v1143
    %v1289 = vunpack.c.l.b16 %v1144
    %v1290 = vunpack.c.l.b16 %v1145
    %v1291 = vunpack.c.l.b16 %v1146
    %v1292 = vunpack.c.l.b16 %v1147
    %v1293 = vpack.c.b16 %v1286, %v1285
    %v1294 = vpack.c.b16 %v1288, %v1287
    %v1295 = vpack.c.b16 %v1290, %v1289
    %v1296 = vpack.c.b16 %v1292, %v1291
    %v1301 = vunpack.c.l.b16 %v1127
    %v1302 = vunpack.c.l.b16 %v1128
    %v1303 = vunpack.c.l.b16 %v1129
    %v1304 = vunpack.c.l.b16 %v1130
    %v1305 = vpack.c.b16 %v1302, %v1301
    %v1306 = vpack.c.b16 %v1304, %v1303
    %v1310 = vsel %vm176, %v1293, 0
    %v1313 = vsel %vm176, %v1294, 0
    %v1316 = vsel %vm176, %v1295, 0
    %v1319 = vsel %vm176, %v1296, 0
    %1321 = vmatprep.subr.bf16.mxu0 0
    %1322 = vmatpush1.bf16.msra.mxu0 0
    %1323 = vmatprep.subr.bf16.mxu0 0
    %1324 = vmatpush1.bf16.msra.mxu0 0
    %1325 = vmatprep.subr.bf16.mxu0 0
    %1326 = vmatpush1.bf16.msra.mxu0 0
    %1327 = vmatprep.subr.bf16.mxu0 0
    %1328 = vmatpush1.bf16.msra.mxu0 0
    %1329 = vmatprep.subr.bf16.mxu0 0
    %1330 = vmatpush1.bf16.msra.mxu0 0
    %1331 = vmatprep.subr.bf16.mxu0 0
    %1332 = vmatpush1.bf16.msra.mxu0 0
    %1333 = vmatprep.subr.bf16.mxu0 0
    %1334 = vmatpush1.bf16.msra.mxu0 %v1306
    %1335 = vmatprep.subr.bf16.mxu0 0
    %1336 = vmatpush1.bf16.msra.mxu0 %v1305
    %1337 = vmatprep.subr.bf16.mxu0 0
    %1338 = vmatpush2.bf16.msra.mxu0 0
    %1339 = vmatprep.subr.bf16.mxu0 0
    %1340 = vmatpush2.bf16.msra.mxu0 0
    %1341 = vmatprep.subr.bf16.mxu0 0
    %1342 = vmatpush2.bf16.msra.mxu0 0
    %1343 = vmatprep.subr.bf16.mxu0 0
    %1344 = vmatpush2.bf16.msra.mxu0 0
    %1345 = vmatprep.subr.bf16.mxu0 0
    %1346 = vmatpush2.bf16.msra.mxu0 0
    %1347 = vmatprep.subr.bf16.mxu0 0
    %1348 = vmatpush2.bf16.msra.mxu0 0
    %1349 = vmatprep.subr.bf16.mxu0 0
    %1350 = vmatpush2.bf16.msra.mxu0 0
    %1351 = vmatprep.subr.bf16.mxu0 0
    %1352 = vmatpush2.bf16.msra.mxu0 0
    %1353 = vmatprep.mubr.bf16.mxu0 0
    %1354 = vmatmul.mubr.bf16.gmra.mxu0 %v1310
    %v1355 = vpop.f32.mrf.mxu0
    %v1356 = vadd.f32 %v1247, %v1355
    %v1357 = vpop.f32.mrf.mxu0
    %v1358 = vpop.f32.mrf.mxu0
    %v1359 = vadd.f32 %v1250, %v1358
    %v1360 = vpop.f32.mrf.mxu0
    %1361 = vmatprep.mubr.bf16.mxu0 0
    %1362 = vmatmul.mubr.bf16.gmra.mxu0 %v1313
    %v1363 = vpop.f32.mrf.mxu0
    %v1364 = vadd.f32 %v1255, %v1363
    %v1365 = vpop.f32.mrf.mxu0
    %v1366 = vpop.f32.mrf.mxu0
    %v1367 = vadd.f32 %v1258, %v1366
    %v1368 = vpop.f32.mrf.mxu0
    %1369 = vmatprep.mubr.bf16.mxu0 0
    %1370 = vmatmul.mubr.bf16.gmra.mxu0 %v1316
    %v1371 = vpop.f32.mrf.mxu0
    %v1372 = vadd.f32 %v1263, %v1371
    %v1373 = vpop.f32.mrf.mxu0
    %v1374 = vpop.f32.mrf.mxu0
    %v1375 = vadd.f32 %v1266, %v1374
    %v1376 = vpop.f32.mrf.mxu0
    %1377 = vmatprep.mubr.bf16.mxu0 0
    %1378 = vmatmul.mubr.bf16.gmra.mxu0 %v1319
    %v1379 = vpop.f32.mrf.mxu0
    %v1380 = vadd.f32 %v1271, %v1379
    %v1381 = vpop.f32.mrf.mxu0
    %v1382 = vpop.f32.mrf.mxu0
    %v1383 = vadd.f32 %v1274, %v1382
    %v1384 = vpop.f32.mrf.mxu0
    %1385 = vdwg.mxu0
    %v1387 = vlaneseq
    %v1388 = vshrl.u32 %v1387, 7
    %v1389 = vsub.s32 0, %v1388
    %v1390 = vrot.slane %v1139, %v1389
    %v1392 = vadd.f32 %v1356, %v1390
    %v1393 = vadd.f32 %v1359, %v1390
    %v1394 = vadd.f32 %v1364, %v1390
    %v1395 = vadd.f32 %v1367, %v1390
    %v1396 = vadd.f32 %v1372, %v1390
    %v1397 = vadd.f32 %v1375, %v1390
    %v1398 = vadd.f32 %v1380, %v1390
    %v1399 = vadd.f32 %v1383, %v1390
    %v1400 = vtanh.pop %v1392
    %v1401 = vtanh.pop %v1393
    %v1402 = vtanh.pop %v1394
    %v1403 = vtanh.pop %v1395
    %v1404 = vtanh.pop %v1396
    %v1405 = vtanh.pop %v1397
    %v1406 = vtanh.pop %v1398
    %v1407 = vtanh.pop %v1399
    %v1408 = vsel %vm176, %v1400, -inf
    %v1409 = vsel %vm176, %v1401, -inf
    %v1410 = vsel %vm176, %v1402, -inf
    %v1411 = vsel %vm176, %v1403, -inf
    %v1412 = vsel %vm176, %v1404, -inf
    %v1413 = vmax.f32 %v1408, %v1412
    %v1414 = vsel %vm176, %v1405, -inf
    %v1415 = vmax.f32 %v1409, %v1414
    %v1416 = vsel %vm176, %v1406, -inf
    %v1417 = vmax.f32 %v1410, %v1416
    %v1418 = vsel %vm176, %v1407, -inf
    %v1419 = vmax.f32 %v1411, %v1418
    %v1420 = vmax.f32 %v1413, %v1415
    %v1421 = vmax.f32 %v1417, %v1419
    %v1422 = vmax.f32 %v1420, %v1421
    %v1423 = vpack.c.bf16 %v1422, %v1422
    %v1424 = vld [vmem:[#allocation10] sm:$0xf]
    %v1425 = vld [vmem:[#allocation10 + $0x4] sm:$0xf]
    %v1426 = vld [vmem:[#allocation10 + $0x8] sm:$0xf]
    %v1427 = vld [vmem:[#allocation10 + $0xc] sm:$0xf]
    %v1428 = vld [vmem:[%s9] sm:$0x1]
    %v1430 = vlaneseq
    %v1431 = vshrl.u32 %v1430, 7
    %v1432 = vsub.s32 0, %v1431
    %v1433 = vrot.slane %v1428, %v1432
    %v1439 = vunpack.c.l.b16 %v1424
    %v1440 = vunpack.c.l.b16 %v1425
    %v1441 = vunpack.c.l.b16 %v1426
    %v1442 = vunpack.c.l.b16 %v1427
    %v1443 = vpack.c.b16 %v1440, %v1439
    %v1444 = vpack.c.b16 %v1442, %v1441
    %v1448 = vsel %vm176, %v1423, 0
    %1450 = vmatprep.subr.bf16.mxu0 0
    %1451 = vmatpush1.bf16.msra.mxu0 0
    %1452 = vmatprep.subr.bf16.mxu0 0
    %1453 = vmatpush1.bf16.msra.mxu0 0
    %1454 = vmatprep.subr.bf16.mxu0 0
    %1455 = vmatpush1.bf16.msra.mxu0 0
    %1456 = vmatprep.subr.bf16.mxu0 0
    %1457 = vmatpush1.bf16.msra.mxu0 0
    %1458 = vmatprep.subr.bf16.mxu0 0
    %1459 = vmatpush1.bf16.msra.mxu0 0
    %1460 = vmatprep.subr.bf16.mxu0 0
    %1461 = vmatpush1.bf16.msra.mxu0 0
    %1462 = vmatprep.subr.bf16.mxu0 0
    %1463 = vmatpush1.bf16.msra.mxu0 %v1444
    %1464 = vmatprep.subr.bf16.mxu0 0
    %1465 = vmatpush1.bf16.msra.mxu0 %v1443
    %1466 = vmatprep.subr.bf16.mxu0 0
    %1467 = vmatpush2.bf16.msra.mxu0 0
    %1468 = vmatprep.subr.bf16.mxu0 0
    %1469 = vmatpush2.bf16.msra.mxu0 0
    %1470 = vmatprep.subr.bf16.mxu0 0
    %1471 = vmatpush2.bf16.msra.mxu0 0
    %1472 = vmatprep.subr.bf16.mxu0 0
    %1473 = vmatpush2.bf16.msra.mxu0 0
    %1474 = vmatprep.subr.bf16.mxu0 0
    %1475 = vmatpush2.bf16.msra.mxu0 0
    %1476 = vmatprep.subr.bf16.mxu0 0
    %1477 = vmatpush2.bf16.msra.mxu0 0
    %1478 = vmatprep.subr.bf16.mxu0 0
    %1479 = vmatpush2.bf16.msra.mxu0 0
    %1480 = vmatprep.subr.bf16.mxu0 0
    %1481 = vmatpush2.bf16.msra.mxu0 0
    %1482 = vmatprep.mubr.bf16.mxu0 0
    %1483 = vmatmul.mubr.bf16.gmra.mxu0 %v1448
    %v1484 = vpop.f32.mrf.mxu0
    %v1485 = vadd.f32 %v1433, %v1484
    %v1486 = vpop.f32.mrf.mxu0
    %v1487 = vpop.f32.mrf.mxu0
    %v1488 = vpop.f32.mrf.mxu0
    %1489 = vdwg.mxu0
    %1490 = vst [vmem:[#allocation12] sm:$0xff] %v1485
    // Predicated region
    $region58: #{tpu_custom_call.1} parent=1 // pred_check
      _
    $region59: #{tpu_custom_call.1} parent=1 // pred_check_branch
      %1492 = sbr.rel (0) target = $region61
    $region60: #{tpu_custom_call.1} parent=1 // pred_region
      %s1494 = ssub.s32 128, 128
      %1495 = vsyncadd [#allocation6], %s1494
      %s1497 = sshll.u32 [#allocation12], 4
      %s1498 = int_to_ptr.vmem [resolvable:$true] %s1497
      %1500 = dma.vmem_to_hbm [thread:$0]  %s1498, 128, %s10, [#allocation6]
    $region61: #{tpu_custom_call.1} parent=1 // pred_fallthru
      _
    // Predicated region
    $region62: #{tpu_custom_call.1} parent=1 // pred_check
      _
    $region63: #{tpu_custom_call.1} parent=1 // pred_check_branch
      %1502 = sbr.rel (0) target = $region65
    $region64: #{tpu_custom_call.1} parent=1 // pred_region
      %1503 = dma.done [#allocation6], 128
    $region65: #{tpu_custom_call.1} parent=1 // pred_fallthru
      _
    %1504 = vsyncpa [#allocation5], 1
    %1505 = vsyncpa [#allocation8], 1
    %1506 = vsyncpa [#allocation11], 1
    %1507 = vsyncpa [#allocation6], 1

</llo_original>
